<compile_context>
chip_gen: v7x
topology: tpu7x:2x2x1
jax: 0.10.0
libtpu: 0.0.40
codegen_flags: <defaults>
</compile_context>

<pallas_src>
import jax
import jax.numpy as jnp
from jax import lax
from jax.experimental import pallas as pl
from jax.experimental.pallas import tpu as pltpu


def _round_up(x, m):
    return ((x + m - 1) // m) * m


def _pick_batch_tile(B):
    """Batch tile (rows), always a multiple of 16 (bf16 sublane packing)."""
    if B >= 2048:
        return 1024                              # few, large grid steps
    if B >= 64:
        return _round_up((B + 1) // 2, 16)       # grid == 2 (even -> both v7x TCs)
    return _round_up(B, 16)                      # tiny batch: single tile


def make_mlp_kernel(cat_offsets, sumc_pad):
    """Build the fused kernel; cat_offsets / sumc_pad are static config."""

    def kernel(xcat_ref, cont_ref, a_ref, c_ref, b1_ref,
               w2_ref, b2_ref, w3_ref, b3_ref, w4_ref, b4_ref,
               w5_ref, b5_ref, o_ref):
        f32 = jnp.float32
        bf16 = jnp.bfloat16
        tb = xcat_ref.shape[0]

        # Fused embedding lookup + concat as a multi-hot matmul:
        # mh[b, off_i + x_cat[b, i]] = 1 for every categorical column i.
        # mh @ A  (A = blockdiag(emb tables) @ W1[:n_emb], prefolded in f32)
        # equals embedding-lookup -> concat -> lin1 exactly.
        idx = xcat_ref[...]                                       # (tb, n_cat) int32
        lane = lax.broadcasted_iota(jnp.int32, (tb, sumc_pad), 1)
        mh = None
        for i, off in enumerate(cat_offsets):                     # static 10-iter loop
            onehot = (lane == (idx[:, i:i + 1] + off)).astype(f32)
            mh = onehot if mh is None else mh + onehot
        mh = mh.astype(bf16)

        # lin1: embedding (multi-hot) path + continuous path, f32 MXU accumulation.
        h = jnp.dot(mh, a_ref[...], preferred_element_type=f32)
        h = h + jnp.dot(cont_ref[...], c_ref[...], preferred_element_type=f32)
        h = jnp.maximum(h + b1_ref[...], 0.0).astype(bf16)        # bn2 == ReLU

        def dense_relu(hh, w_ref, b_ref):
            y = jnp.dot(hh, w_ref[...], preferred_element_type=f32) + b_ref[...]
            return jnp.maximum(y, 0.0).astype(bf16)

        h = dense_relu(h, w2_ref, b2_ref)      # lin2 -> ReLU (bn3) -> [drop = id]
        h = dense_relu(h, w3_ref, b3_ref)      # lin3 -> ReLU (bn4) -> [drop = id]
        h = dense_relu(h, w4_ref, b4_ref)      # lin4 -> ReLU (output), lanes padded to 128
        # lin5 -> sigmoid * 4 (only lane 0 is real; the rest are zero pads).
        y = jnp.dot(h, w5_ref[...], preferred_element_type=f32) + b5_ref[...]
        o_ref[...] = (jax.nn.sigmoid(y) * 4.0).astype(o_ref.dtype)

    return kernel


def petfinder_mlp(x_cat, x_cont, params, cfg, tb):
    """x_cat: (B, n_cat) int32, x_cont: (B, ncont_pad) bf16, B % tb == 0."""
    A, C, b1, w2, b2, w3, b3, w4, b4, w5, b5 = params
    B = x_cat.shape[0]
    assert B % tb == 0 and tb % 16 == 0

    kernel = make_mlp_kernel(cfg["cat_offsets"], cfg["sumc_pad"])

    def resident(a):
        # Whole-array block with a constant index_map: DMA'd once, stays
        # resident in VMEM for the full grid (total working set < 0.5 MiB).
        return pl.BlockSpec(a.shape, lambda i: (0,) * a.ndim)

    in_specs = [
        pl.BlockSpec((tb, x_cat.shape[1]), lambda i: (i, 0)),
        pl.BlockSpec((tb, x_cont.shape[1]), lambda i: (i, 0)),
        resident(A), resident(C), resident(b1),
        resident(w2), resident(b2), resident(w3), resident(b3),
        resident(w4), resident(b4), resident(w5), resident(b5),
    ]
    # Lane-dense (tb, 128) bf16 output block -> unmasked vector stores and half
    # the HBM writeback of f32; the wrapper slices lane 0.
    out_specs = pl.BlockSpec((tb, 128), lambda i: (i, 0))

    weights = (A, C, w2, w3, w4, w5)
    flops = 2 * B * sum(int(w.shape[0]) * int(w.shape[1]) for w in weights)
    bytes_accessed = (
        sum(int(p.size) * int(p.dtype.itemsize) for p in params)
        + int(x_cat.size) * 4 + int(x_cont.size) * 2 + B * 128 * 2)
    cost = pl.CostEstimate(flops=flops, transcendentals=B * 128,
                           bytes_accessed=bytes_accessed)

    return pl.pallas_call(
        kernel,
        grid=(B // tb,),
        in_specs=in_specs,
        out_specs=out_specs,
        out_shape=jax.ShapeDtypeStruct((B, 128), jnp.bfloat16),
        compiler_params=pltpu.CompilerParams(dimension_semantics=("parallel",)),
        cost_estimate=cost,
    )(x_cat, x_cont, A, C, b1, w2, b2, w3, b3, w4, b4, w5, b5)


def init_params(key, embedding_sizes, n_cont):
    """PyTorch-default init: Embedding ~ N(0,1); Linear W,b ~ U(+-1/sqrt(fan_in))."""
    n_emb = sum(d for _, d in embedding_sizes)
    keys = jax.random.split(key, len(embedding_sizes) + 5)

    emb_tables = [
        jax.random.normal(k, (cats, dim), jnp.float32)
        for k, (cats, dim) in zip(keys[: len(embedding_sizes)], embedding_sizes)
    ]

    dims = [n_emb + n_cont, 512, 256, 128, 32, 1]
    lins = []
    for li, lk in enumerate(keys[len(embedding_sizes):]):
        fan_in, fan_out = dims[li], dims[li + 1]
        bound = 1.0 / float(fan_in) ** 0.5
        wk, bk = jax.random.split(lk)
        w = jax.random.uniform(wk, (fan_in, fan_out), jnp.float32, -bound, bound)
        b = jax.random.uniform(bk, (1, fan_out), jnp.float32, -bound, bound)
        lins += [w, b]
    return emb_tables, lins


def prepare_fused_params(emb_tables, lins):
    """One-time parameter prep for the fused kernel.

    * Folds embedding tables + concat into lin1:  A = blockdiag(tables) @ W1[:n_emb]
      (computed in f32, mathematically exact), so multihot(x_cat) @ A reproduces
      the lookup->concat->lin1 path.
    * Continuous path: C = W1[n_emb:], rows zero-padded to a multiple of 16.
    * Zero-pads lin4/lin5 output lanes to 128 (zeros stay zero through ReLU and
      do not affect lane 0 of lin5), weights in bf16, biases f32.
    """
    w1, b1, w2, b2, w3, b3, w4, b4, w5, b5 = lins
    cats = [int(t.shape[0]) for t in emb_tables]
    dims = [int(t.shape[1]) for t in emb_tables]
    n_emb = sum(dims)
    n_cont = int(w1.shape[0]) - n_emb

    cat_offsets, acc = [], 0
    for c in cats:
        cat_offsets.append(acc)
        acc += c
    sumc_pad = _round_up(acc, 128)
    ncont_pad = _round_up(n_cont, 16)

    w_emb = jnp.zeros((sumc_pad, n_emb), jnp.float32)
    col = 0
    for off, t in zip(cat_offsets, emb_tables):
        w_emb = w_emb.at[off:off + t.shape[0], col:col + t.shape[1]].set(t)
        col += t.shape[1]

    A = w_emb @ w1[:n_emb, :]                                       # (sumc_pad, 512)
    C = jnp.zeros((ncont_pad, w1.shape[1]), jnp.float32).at[:n_cont, :].set(w1[n_emb:, :])

    w4p = jnp.zeros((w4.shape[0], 128), jnp.float32).at[:, : w4.shape[1]].set(w4)
    b4p = jnp.zeros((1, 128), jnp.float32).at[:, : b4.shape[1]].set(b4)
    w5p = jnp.zeros((128, 128), jnp.float32).at[: w5.shape[0], : w5.shape[1]].set(w5)
    b5p = jnp.zeros((1, 128), jnp.float32).at[:, : b5.shape[1]].set(b5)

    bf = jnp.bfloat16
    params = (A.astype(bf), C.astype(bf), b1,
              w2.astype(bf), b2, w3.astype(bf), b3,
              w4p.astype(bf), b4p, w5p.astype(bf), b5p)
    cfg = {"cat_offsets": tuple(cat_offsets), "sumc_pad": sumc_pad,
           "ncont_pad": ncont_pad, "n_cont": n_cont}
    return params, cfg


def petfinder_forward(x_cat, x_cont, params, cfg, tb=None):
    """Full forward (eval mode).  Only glue left outside the kernel is casting
    and batch/lane zero-padding — the embedding gather/concat lives in-kernel."""
    B = x_cat.shape[0]
    if tb is None:
        tb = _pick_batch_tile(B)
    B_pad = _round_up(B, tb)

    xc = jnp.pad(x_cat.astype(jnp.int32), ((0, B_pad - B), (0, 0)))
    xn = jnp.pad(x_cont.astype(jnp.bfloat16),
                 ((0, B_pad - B), (0, cfg["ncont_pad"] - cfg["n_cont"])))
    out = petfinder_mlp(xc, xn, params, cfg, tb)
    return out[:B, 0:1].astype(jnp.float32)      # real output lives in lane 0


def petfinder_reference(x_cat, x_cont, emb_tables, lins):
    """Pure-JAX f32 reference matching the PyTorch forward (eval mode)."""
    embs = [jnp.take(t, x_cat[:, i], axis=0) for i, t in enumerate(emb_tables)]
    x = jnp.concatenate(embs + [x_cont.astype(jnp.float32)], axis=1)
    w1, b1, w2, b2, w3, b3, w4, b4, w5, b5 = lins
    h = jax.nn.relu(x @ w1 + b1)
    h = jax.nn.relu(h @ w2 + b2)
    h = jax.nn.relu(h @ w3 + b3)
    h = jax.nn.relu(h @ w4 + b4)
    return jax.nn.sigmoid(h @ w5 + b5) * 4.0


def _make_inputs(key, batch, categories, n_cont):
    ckey, xkey = jax.random.split(key)
    cat_keys = jax.random.split(ckey, len(categories))
    x_cat = jnp.stack(
        [jax.random.randint(k, (batch,), 0, c) for k, c in zip(cat_keys, categories)],
        axis=1,
    ).astype(jnp.int32)
    x_cont = jax.random.normal(xkey, (batch, n_cont), jnp.float32)
    return x_cat, x_cont


if __name__ == "__main__":
    key = jax.random.PRNGKey(0)

    # 10 categorical columns (mirrors cat_cols), small synthetic cardinalities.
    categories = [12, 9, 3, 7, 7, 7, 15, 20, 10, 6]
    emb_dims = [6, 5, 2, 4, 4, 4, 8, 10, 5, 3]
    embedding_sizes = list(zip(categories, emb_dims))
    n_cont = 13

    pkey, ikey1, ikey2 = jax.random.split(key, 3)
    emb_tables, lins = init_params(pkey, embedding_sizes, n_cont)
    params, cfg = prepare_fused_params(emb_tables, lins)

    def check(batch, ikey):
        x_cat, x_cont = _make_inputs(ikey, batch, categories, n_cont)
        out = jax.block_until_ready(petfinder_forward(x_cat, x_cont, params, cfg))
        ref = petfinder_reference(x_cat, x_cont, emb_tables, lins)
        assert out.shape == (batch, 1)
        assert bool(jnp.all(jnp.isfinite(out)))
        assert bool(jnp.all((out >= 0.0) & (out <= 4.0)))
        # bf16 weights/activations vs f32 reference: loose tolerance.
        assert bool(jnp.max(jnp.abs(out - ref)) < 1e-1)

    check(4, ikey1)     # tiny batch: single 16-row tile
    check(512, ikey2)   # realistic batch: tb=256, even 2-step grid (v7x megacore)
    print("KERNEL_OK")
</pallas_src>

<mosaic_0001>
module attributes {stable_mosaic.version = 11 : i64} {
  func.func @kernel(%arg0: i32, %arg1: memref<16x10xi32, #tpu.memory_space<vmem>>, %arg2: memref<16x16xbf16, #tpu.memory_space<vmem>>, %arg3: memref<128x512xbf16, #tpu.memory_space<vmem>>, %arg4: memref<16x512xbf16, #tpu.memory_space<vmem>>, %arg5: memref<1x512xf32, #tpu.memory_space<vmem>>, %arg6: memref<512x256xbf16, #tpu.memory_space<vmem>>, %arg7: memref<1x256xf32, #tpu.memory_space<vmem>>, %arg8: memref<256x128xbf16, #tpu.memory_space<vmem>>, %arg9: memref<1x128xf32, #tpu.memory_space<vmem>>, %arg10: memref<128x128xbf16, #tpu.memory_space<vmem>>, %arg11: memref<1x128xf32, #tpu.memory_space<vmem>>, %arg12: memref<128x128xbf16, #tpu.memory_space<vmem>>, %arg13: memref<1x128xf32, #tpu.memory_space<vmem>>, %arg14: memref<16x128xbf16, #tpu.memory_space<vmem>>) attributes {dimension_semantics = [#tpu.dimension_semantics<parallel>], iteration_bounds = array<i64: 1>, scalar_prefetch = 0 : i64, scratch_operands = 0 : i64, tpu.core_type = #tpu.core_type<tc>, window_params = [{transform_indices = @transform_0, window_bounds = array<i64: 16, 10>}, {transform_indices = @transform_1, window_bounds = array<i64: 16, 16>}, {pipeline_mode = #tpu.pipeline_mode<synchronous>, transform_indices = @transform_2, window_bounds = array<i64: 128, 512>}, {pipeline_mode = #tpu.pipeline_mode<synchronous>, transform_indices = @transform_3, window_bounds = array<i64: 16, 512>}, {pipeline_mode = #tpu.pipeline_mode<synchronous>, transform_indices = @transform_4, window_bounds = array<i64: 1, 512>}, {pipeline_mode = #tpu.pipeline_mode<synchronous>, transform_indices = @transform_5, window_bounds = array<i64: 512, 256>}, {pipeline_mode = #tpu.pipeline_mode<synchronous>, transform_indices = @transform_6, window_bounds = array<i64: 1, 256>}, {pipeline_mode = #tpu.pipeline_mode<synchronous>, transform_indices = @transform_7, window_bounds = array<i64: 256, 128>}, {pipeline_mode = #tpu.pipeline_mode<synchronous>, transform_indices = @transform_8, window_bounds = array<i64: 1, 128>}, {pipeline_mode = #tpu.pipeline_mode<synchronous>, transform_indices = @transform_9, window_bounds = array<i64: 128, 128>}, {pipeline_mode = #tpu.pipeline_mode<synchronous>, transform_indices = @transform_10, window_bounds = array<i64: 1, 128>}, {pipeline_mode = #tpu.pipeline_mode<synchronous>, transform_indices = @transform_11, window_bounds = array<i64: 128, 128>}, {pipeline_mode = #tpu.pipeline_mode<synchronous>, transform_indices = @transform_12, window_bounds = array<i64: 1, 128>}, {transform_indices = @transform_13, window_bounds = array<i64: 16, 128>}]} {
    %c0 = arith.constant 0 : index
    %c0_0 = arith.constant 0 : index
    %0 = vector.load %arg1[%c0, %c0_0] : memref<16x10xi32, #tpu.memory_space<vmem>>, vector<16x10xi32>
    %1 = tpu.iota {dimensions = array<i32: 1>} : vector<16x128xi32>
    %2 = vector.extract_strided_slice %0 {offsets = [0, 0], sizes = [16, 1], strides = [1, 1]} : vector<16x10xi32> to vector<16x1xi32>
    %c0_i32 = arith.constant 0 : i32
    %3 = vector.broadcast %c0_i32 : i32 to vector<16x1xi32>
    %4 = arith.addi %2, %3 : vector<16x1xi32>
    %5 = vector.broadcast %4 : vector<16x1xi32> to vector<16x128xi32>
    %6 = arith.cmpi eq, %1, %5 : vector<16x128xi32>
    %7 = arith.extui %6 : vector<16x128xi1> to vector<16x128xi32>
    %8 = arith.sitofp %7 : vector<16x128xi32> to vector<16x128xf32>
    %9 = vector.extract_strided_slice %0 {offsets = [0, 1], sizes = [16, 1], strides = [1, 1]} : vector<16x10xi32> to vector<16x1xi32>
    %c12_i32 = arith.constant 12 : i32
    %10 = vector.broadcast %c12_i32 : i32 to vector<16x1xi32>
    %11 = arith.addi %9, %10 : vector<16x1xi32>
    %12 = vector.broadcast %11 : vector<16x1xi32> to vector<16x128xi32>
    %13 = arith.cmpi eq, %1, %12 : vector<16x128xi32>
    %14 = arith.extui %13 : vector<16x128xi1> to vector<16x128xi32>
    %15 = arith.sitofp %14 : vector<16x128xi32> to vector<16x128xf32>
    %16 = arith.addf %8, %15 : vector<16x128xf32>
    %17 = vector.extract_strided_slice %0 {offsets = [0, 2], sizes = [16, 1], strides = [1, 1]} : vector<16x10xi32> to vector<16x1xi32>
    %c21_i32 = arith.constant 21 : i32
    %18 = vector.broadcast %c21_i32 : i32 to vector<16x1xi32>
    %19 = arith.addi %17, %18 : vector<16x1xi32>
    %20 = vector.broadcast %19 : vector<16x1xi32> to vector<16x128xi32>
    %21 = arith.cmpi eq, %1, %20 : vector<16x128xi32>
    %22 = arith.extui %21 : vector<16x128xi1> to vector<16x128xi32>
    %23 = arith.sitofp %22 : vector<16x128xi32> to vector<16x128xf32>
    %24 = arith.addf %16, %23 : vector<16x128xf32>
    %25 = vector.extract_strided_slice %0 {offsets = [0, 3], sizes = [16, 1], strides = [1, 1]} : vector<16x10xi32> to vector<16x1xi32>
    %c24_i32 = arith.constant 24 : i32
    %26 = vector.broadcast %c24_i32 : i32 to vector<16x1xi32>
    %27 = arith.addi %25, %26 : vector<16x1xi32>
    %28 = vector.broadcast %27 : vector<16x1xi32> to vector<16x128xi32>
    %29 = arith.cmpi eq, %1, %28 : vector<16x128xi32>
    %30 = arith.extui %29 : vector<16x128xi1> to vector<16x128xi32>
    %31 = arith.sitofp %30 : vector<16x128xi32> to vector<16x128xf32>
    %32 = arith.addf %24, %31 : vector<16x128xf32>
    %33 = vector.extract_strided_slice %0 {offsets = [0, 4], sizes = [16, 1], strides = [1, 1]} : vector<16x10xi32> to vector<16x1xi32>
    %c31_i32 = arith.constant 31 : i32
    %34 = vector.broadcast %c31_i32 : i32 to vector<16x1xi32>
    %35 = arith.addi %33, %34 : vector<16x1xi32>
    %36 = vector.broadcast %35 : vector<16x1xi32> to vector<16x128xi32>
    %37 = arith.cmpi eq, %1, %36 : vector<16x128xi32>
    %38 = arith.extui %37 : vector<16x128xi1> to vector<16x128xi32>
    %39 = arith.sitofp %38 : vector<16x128xi32> to vector<16x128xf32>
    %40 = arith.addf %32, %39 : vector<16x128xf32>
    %41 = vector.extract_strided_slice %0 {offsets = [0, 5], sizes = [16, 1], strides = [1, 1]} : vector<16x10xi32> to vector<16x1xi32>
    %c38_i32 = arith.constant 38 : i32
    %42 = vector.broadcast %c38_i32 : i32 to vector<16x1xi32>
    %43 = arith.addi %41, %42 : vector<16x1xi32>
    %44 = vector.broadcast %43 : vector<16x1xi32> to vector<16x128xi32>
    %45 = arith.cmpi eq, %1, %44 : vector<16x128xi32>
    %46 = arith.extui %45 : vector<16x128xi1> to vector<16x128xi32>
    %47 = arith.sitofp %46 : vector<16x128xi32> to vector<16x128xf32>
    %48 = arith.addf %40, %47 : vector<16x128xf32>
    %49 = vector.extract_strided_slice %0 {offsets = [0, 6], sizes = [16, 1], strides = [1, 1]} : vector<16x10xi32> to vector<16x1xi32>
    %c45_i32 = arith.constant 45 : i32
    %50 = vector.broadcast %c45_i32 : i32 to vector<16x1xi32>
    %51 = arith.addi %49, %50 : vector<16x1xi32>
    %52 = vector.broadcast %51 : vector<16x1xi32> to vector<16x128xi32>
    %53 = arith.cmpi eq, %1, %52 : vector<16x128xi32>
    %54 = arith.extui %53 : vector<16x128xi1> to vector<16x128xi32>
    %55 = arith.sitofp %54 : vector<16x128xi32> to vector<16x128xf32>
    %56 = arith.addf %48, %55 : vector<16x128xf32>
    %57 = vector.extract_strided_slice %0 {offsets = [0, 7], sizes = [16, 1], strides = [1, 1]} : vector<16x10xi32> to vector<16x1xi32>
    %c60_i32 = arith.constant 60 : i32
    %58 = vector.broadcast %c60_i32 : i32 to vector<16x1xi32>
    %59 = arith.addi %57, %58 : vector<16x1xi32>
    %60 = vector.broadcast %59 : vector<16x1xi32> to vector<16x128xi32>
    %61 = arith.cmpi eq, %1, %60 : vector<16x128xi32>
    %62 = arith.extui %61 : vector<16x128xi1> to vector<16x128xi32>
    %63 = arith.sitofp %62 : vector<16x128xi32> to vector<16x128xf32>
    %64 = arith.addf %56, %63 : vector<16x128xf32>
    %65 = vector.extract_strided_slice %0 {offsets = [0, 8], sizes = [16, 1], strides = [1, 1]} : vector<16x10xi32> to vector<16x1xi32>
    %c80_i32 = arith.constant 80 : i32
    %66 = vector.broadcast %c80_i32 : i32 to vector<16x1xi32>
    %67 = arith.addi %65, %66 : vector<16x1xi32>
    %68 = vector.broadcast %67 : vector<16x1xi32> to vector<16x128xi32>
    %69 = arith.cmpi eq, %1, %68 : vector<16x128xi32>
    %70 = arith.extui %69 : vector<16x128xi1> to vector<16x128xi32>
    %71 = arith.sitofp %70 : vector<16x128xi32> to vector<16x128xf32>
    %72 = arith.addf %64, %71 : vector<16x128xf32>
    %73 = vector.extract_strided_slice %0 {offsets = [0, 9], sizes = [16, 1], strides = [1, 1]} : vector<16x10xi32> to vector<16x1xi32>
    %c90_i32 = arith.constant 90 : i32
    %74 = vector.broadcast %c90_i32 : i32 to vector<16x1xi32>
    %75 = arith.addi %73, %74 : vector<16x1xi32>
    %76 = vector.broadcast %75 : vector<16x1xi32> to vector<16x128xi32>
    %77 = arith.cmpi eq, %1, %76 : vector<16x128xi32>
    %78 = arith.extui %77 : vector<16x128xi1> to vector<16x128xi32>
    %79 = arith.sitofp %78 : vector<16x128xi32> to vector<16x128xf32>
    %80 = arith.addf %72, %79 : vector<16x128xf32>
    %81 = arith.truncf %80 : vector<16x128xf32> to vector<16x128xbf16>
    %c0_1 = arith.constant 0 : index
    %c0_2 = arith.constant 0 : index
    %82 = vector.load %arg3[%c0_1, %c0_2] : memref<128x512xbf16, #tpu.memory_space<vmem>>, vector<128x512xbf16>
    %cst = arith.constant dense<0.000000e+00> : vector<16x512xf32>
    %83 = tpu.matmul %81, %82, %cst {dimension_numbers = #tpu.dot_dimension_numbers<[1], [0], [0], [1], [0, 0, 1, 1], [], []>} : vector<16x128xbf16>, vector<128x512xbf16>, vector<16x512xf32> -> vector<16x512xf32>
    %c0_3 = arith.constant 0 : index
    %c0_4 = arith.constant 0 : index
    %84 = vector.load %arg2[%c0_3, %c0_4] : memref<16x16xbf16, #tpu.memory_space<vmem>>, vector<16x16xbf16>
    %c0_5 = arith.constant 0 : index
    %c0_6 = arith.constant 0 : index
    %85 = vector.load %arg4[%c0_5, %c0_6] : memref<16x512xbf16, #tpu.memory_space<vmem>>, vector<16x512xbf16>
    %cst_7 = arith.constant dense<0.000000e+00> : vector<16x512xf32>
    %86 = tpu.matmul %84, %85, %cst_7 {dimension_numbers = #tpu.dot_dimension_numbers<[1], [0], [0], [1], [0, 0, 1, 1], [], []>} : vector<16x16xbf16>, vector<16x512xbf16>, vector<16x512xf32> -> vector<16x512xf32>
    %87 = arith.addf %83, %86 : vector<16x512xf32>
    %c0_8 = arith.constant 0 : index
    %c0_9 = arith.constant 0 : index
    %88 = vector.load %arg5[%c0_8, %c0_9] : memref<1x512xf32, #tpu.memory_space<vmem>>, vector<1x512xf32>
    %89 = vector.broadcast %88 : vector<1x512xf32> to vector<16x512xf32>
    %90 = arith.addf %87, %89 : vector<16x512xf32>
    %cst_10 = arith.constant 0.000000e+00 : f32
    %91 = vector.broadcast %cst_10 : f32 to vector<16x512xf32>
    %92 = arith.maximumf %90, %91 : vector<16x512xf32>
    %93 = arith.truncf %92 : vector<16x512xf32> to vector<16x512xbf16>
    %c0_11 = arith.constant 0 : index
    %c0_12 = arith.constant 0 : index
    %94 = vector.load %arg6[%c0_11, %c0_12] : memref<512x256xbf16, #tpu.memory_space<vmem>>, vector<512x256xbf16>
    %cst_13 = arith.constant dense<0.000000e+00> : vector<16x256xf32>
    %95 = tpu.matmul %93, %94, %cst_13 {dimension_numbers = #tpu.dot_dimension_numbers<[1], [0], [0], [1], [0, 0, 1, 1], [], []>} : vector<16x512xbf16>, vector<512x256xbf16>, vector<16x256xf32> -> vector<16x256xf32>
    %c0_14 = arith.constant 0 : index
    %c0_15 = arith.constant 0 : index
    %96 = vector.load %arg7[%c0_14, %c0_15] : memref<1x256xf32, #tpu.memory_space<vmem>>, vector<1x256xf32>
    %97 = vector.broadcast %96 : vector<1x256xf32> to vector<16x256xf32>
    %98 = arith.addf %95, %97 : vector<16x256xf32>
    %cst_16 = arith.constant 0.000000e+00 : f32
    %99 = vector.broadcast %cst_16 : f32 to vector<16x256xf32>
    %100 = arith.maximumf %98, %99 : vector<16x256xf32>
    %101 = arith.truncf %100 : vector<16x256xf32> to vector<16x256xbf16>
    %c0_17 = arith.constant 0 : index
    %c0_18 = arith.constant 0 : index
    %102 = vector.load %arg8[%c0_17, %c0_18] : memref<256x128xbf16, #tpu.memory_space<vmem>>, vector<256x128xbf16>
    %cst_19 = arith.constant dense<0.000000e+00> : vector<16x128xf32>
    %103 = tpu.matmul %101, %102, %cst_19 {dimension_numbers = #tpu.dot_dimension_numbers<[1], [0], [0], [1], [0, 0, 1, 1], [], []>} : vector<16x256xbf16>, vector<256x128xbf16>, vector<16x128xf32> -> vector<16x128xf32>
    %c0_20 = arith.constant 0 : index
    %c0_21 = arith.constant 0 : index
    %104 = vector.load %arg9[%c0_20, %c0_21] : memref<1x128xf32, #tpu.memory_space<vmem>>, vector<1x128xf32>
    %105 = vector.broadcast %104 : vector<1x128xf32> to vector<16x128xf32>
    %106 = arith.addf %103, %105 : vector<16x128xf32>
    %cst_22 = arith.constant 0.000000e+00 : f32
    %107 = vector.broadcast %cst_22 : f32 to vector<16x128xf32>
    %108 = arith.maximumf %106, %107 : vector<16x128xf32>
    %109 = arith.truncf %108 : vector<16x128xf32> to vector<16x128xbf16>
    %c0_23 = arith.constant 0 : index
    %c0_24 = arith.constant 0 : index
    %110 = vector.load %arg10[%c0_23, %c0_24] : memref<128x128xbf16, #tpu.memory_space<vmem>>, vector<128x128xbf16>
    %cst_25 = arith.constant dense<0.000000e+00> : vector<16x128xf32>
    %111 = tpu.matmul %109, %110, %cst_25 {dimension_numbers = #tpu.dot_dimension_numbers<[1], [0], [0], [1], [0, 0, 1, 1], [], []>} : vector<16x128xbf16>, vector<128x128xbf16>, vector<16x128xf32> -> vector<16x128xf32>
    %c0_26 = arith.constant 0 : index
    %c0_27 = arith.constant 0 : index
    %112 = vector.load %arg11[%c0_26, %c0_27] : memref<1x128xf32, #tpu.memory_space<vmem>>, vector<1x128xf32>
    %113 = vector.broadcast %112 : vector<1x128xf32> to vector<16x128xf32>
    %114 = arith.addf %111, %113 : vector<16x128xf32>
    %cst_28 = arith.constant 0.000000e+00 : f32
    %115 = vector.broadcast %cst_28 : f32 to vector<16x128xf32>
    %116 = arith.maximumf %114, %115 : vector<16x128xf32>
    %117 = arith.truncf %116 : vector<16x128xf32> to vector<16x128xbf16>
    %c0_29 = arith.constant 0 : index
    %c0_30 = arith.constant 0 : index
    %118 = vector.load %arg12[%c0_29, %c0_30] : memref<128x128xbf16, #tpu.memory_space<vmem>>, vector<128x128xbf16>
    %cst_31 = arith.constant dense<0.000000e+00> : vector<16x128xf32>
    %119 = tpu.matmul %117, %118, %cst_31 {dimension_numbers = #tpu.dot_dimension_numbers<[1], [0], [0], [1], [0, 0, 1, 1], [], []>} : vector<16x128xbf16>, vector<128x128xbf16>, vector<16x128xf32> -> vector<16x128xf32>
    %c0_32 = arith.constant 0 : index
    %c0_33 = arith.constant 0 : index
    %120 = vector.load %arg13[%c0_32, %c0_33] : memref<1x128xf32, #tpu.memory_space<vmem>>, vector<1x128xf32>
    %121 = vector.broadcast %120 : vector<1x128xf32> to vector<16x128xf32>
    %122 = arith.addf %119, %121 : vector<16x128xf32>
    %123 = arith.negf %122 : vector<16x128xf32>
    %124 = math.exp %123 : vector<16x128xf32>
    %cst_34 = arith.constant 1.000000e+00 : f32
    %125 = vector.broadcast %cst_34 : f32 to vector<16x128xf32>
    %126 = arith.addf %125, %124 : vector<16x128xf32>
    %127 = arith.divf %125, %126 : vector<16x128xf32>
    %cst_35 = arith.constant 4.000000e+00 : f32
    %128 = vector.broadcast %cst_35 : f32 to vector<16x128xf32>
    %129 = arith.mulf %127, %128 : vector<16x128xf32>
    %130 = arith.truncf %129 : vector<16x128xf32> to vector<16x128xbf16>
    %c0_36 = arith.constant 0 : index
    %c0_37 = arith.constant 0 : index
    %131 = vector.load %arg14[%c0_36, %c0_37] : memref<16x128xbf16, #tpu.memory_space<vmem>>, vector<16x128xbf16>
    tpu.vector_store %arg14[%c0_36, %c0_37], %130 {strides = array<i32>} : memref<16x128xbf16, #tpu.memory_space<vmem>>, vector<16x128xbf16>,
    return
  }
  func.func @transform_0(%arg0: i32) -> (i32, i32) {
    %c0_i32 = arith.constant 0 : i32
    %c0_i32_0 = arith.constant 0 : i32
    return %arg0, %c0_i32 : i32, i32
  }
  func.func @transform_1(%arg0: i32) -> (i32, i32) {
    %c0_i32 = arith.constant 0 : i32
    %c0_i32_0 = arith.constant 0 : i32
    return %arg0, %c0_i32 : i32, i32
  }
  func.func @transform_2(%arg0: i32) -> (i32, i32) {
    %c0_i32 = arith.constant 0 : i32
    %c0_i32_0 = arith.constant 0 : i32
    %c0_i32_1 = arith.constant 0 : i32
    return %c0_i32, %c0_i32_0 : i32, i32
  }
  func.func @transform_3(%arg0: i32) -> (i32, i32) {
    %c0_i32 = arith.constant 0 : i32
    %c0_i32_0 = arith.constant 0 : i32
    %c0_i32_1 = arith.constant 0 : i32
    return %c0_i32, %c0_i32_0 : i32, i32
  }
  func.func @transform_4(%arg0: i32) -> (i32, i32) {
    %c0_i32 = arith.constant 0 : i32
    %c0_i32_0 = arith.constant 0 : i32
    %c0_i32_1 = arith.constant 0 : i32
    return %c0_i32, %c0_i32_0 : i32, i32
  }
  func.func @transform_5(%arg0: i32) -> (i32, i32) {
    %c0_i32 = arith.constant 0 : i32
    %c0_i32_0 = arith.constant 0 : i32
    %c0_i32_1 = arith.constant 0 : i32
    return %c0_i32, %c0_i32_0 : i32, i32
  }
  func.func @transform_6(%arg0: i32) -> (i32, i32) {
    %c0_i32 = arith.constant 0 : i32
    %c0_i32_0 = arith.constant 0 : i32
    %c0_i32_1 = arith.constant 0 : i32
    return %c0_i32, %c0_i32_0 : i32, i32
  }
  func.func @transform_7(%arg0: i32) -> (i32, i32) {
    %c0_i32 = arith.constant 0 : i32
    %c0_i32_0 = arith.constant 0 : i32
    %c0_i32_1 = arith.constant 0 : i32
    return %c0_i32, %c0_i32_0 : i32, i32
  }
  func.func @transform_8(%arg0: i32) -> (i32, i32) {
    %c0_i32 = arith.constant 0 : i32
    %c0_i32_0 = arith.constant 0 : i32
    %c0_i32_1 = arith.constant 0 : i32
    return %c0_i32, %c0_i32_0 : i32, i32
  }
  func.func @transform_9(%arg0: i32) -> (i32, i32) {
    %c0_i32 = arith.constant 0 : i32
    %c0_i32_0 = arith.constant 0 : i32
    %c0_i32_1 = arith.constant 0 : i32
    return %c0_i32, %c0_i32_0 : i32, i32
  }
  func.func @transform_10(%arg0: i32) -> (i32, i32) {
    %c0_i32 = arith.constant 0 : i32
    %c0_i32_0 = arith.constant 0 : i32
    %c0_i32_1 = arith.constant 0 : i32
    return %c0_i32, %c0_i32_0 : i32, i32
  }
  func.func @transform_11(%arg0: i32) -> (i32, i32) {
    %c0_i32 = arith.constant 0 : i32
    %c0_i32_0 = arith.constant 0 : i32
    %c0_i32_1 = arith.constant 0 : i32
    return %c0_i32, %c0_i32_0 : i32, i32
  }
  func.func @transform_12(%arg0: i32) -> (i32, i32) {
    %c0_i32 = arith.constant 0 : i32
    %c0_i32_0 = arith.constant 0 : i32
    %c0_i32_1 = arith.constant 0 : i32
    return %c0_i32, %c0_i32_0 : i32, i32
  }
  func.func @transform_13(%arg0: i32) -> (i32, i32) {
    %c0_i32 = arith.constant 0 : i32
    %c0_i32_0 = arith.constant 0 : i32
    return %arg0, %c0_i32 : i32, i32
  }
}

</mosaic_0001>

<llo_original>
// kernel: tpu_custom_call.1
$region0: #{tpu_custom_call.1}
  #allocation0 [shape = 'u32[]', space=smem, size = 0x4, offset = 0x4, fixed_abs, tag = 'smem constant byte address 0x4 - core index']
  #allocation1 [shape = 'u32[144,128]{1,0:T(1,128)}', space=vmem, size = 0x12000, scoped, tag = 'internal scratch']
  %s0 = inlined_call_operand.hbm [shape: s32[16,10], index: 0, kind: input, shape index: {}]
  %s1 = inlined_call_operand.hbm [shape: bf16[16,16], index: 1, kind: input, shape index: {}]
  %s2 = inlined_call_operand.hbm [shape: bf16[128,512], index: 2, kind: input, shape index: {}]
  %s3 = inlined_call_operand.hbm [shape: bf16[16,512], index: 3, kind: input, shape index: {}]
  %s4 = inlined_call_operand.vmem [shape: f32[1,512], index: 4, kind: input, shape index: {}]
  %s5 = inlined_call_operand.hbm [shape: bf16[512,256], index: 5, kind: input, shape index: {}]
  %s6 = inlined_call_operand.vmem [shape: f32[1,256], index: 6, kind: input, shape index: {}]
  %s7 = inlined_call_operand.hbm [shape: bf16[256,128], index: 7, kind: input, shape index: {}]
  %s8 = inlined_call_operand.vmem [shape: f32[1,128], index: 8, kind: input, shape index: {}]
  %s9 = inlined_call_operand.hbm [shape: bf16[128,128], index: 9, kind: input, shape index: {}]
  %s10 = inlined_call_operand.vmem [shape: f32[1,128], index: 10, kind: input, shape index: {}]
  %s11 = inlined_call_operand.hbm [shape: bf16[128,128], index: 11, kind: input, shape index: {}]
  %s12 = inlined_call_operand.vmem [shape: f32[1,128], index: 12, kind: input, shape index: {}]
  %s13 = inlined_call_operand.hbm [shape: bf16[16,128], index: 13, kind: output, shape index: {}]
  %s14 = sld [smem:[#allocation0]]
  $region94: #{tpu_custom_call.1} parent=0
    _
  %s16 = ssub.s32 1, %s14
  %s17 = scalar_select 0, %s16, %s14
  $region1: #{tpu_custom_call.1} parent=0
    #allocation2 [shape = 'u8[8192]{0}', space=vmem, size = 0x2000, scoped, tag = 'input window, operand 0, single buffered']
    #allocation3 [shape = 's32[1]{0}', space=sflag, size = 0x4, scoped, tag = 'scoped memory for tpu_custom_call.1']
    #allocation4 [shape = 's32[1]{0}', space=sflag, size = 0x4, scoped, tag = 'scoped memory for tpu_custom_call.1']
    #allocation5 [shape = 'u8[4096]{0}', space=vmem, size = 0x1000, scoped, tag = 'input window, operand 1, single buffered']
    #allocation6 [shape = 's32[1]{0}', space=sflag, size = 0x4, scoped, tag = 'scoped memory for tpu_custom_call.1']
    #allocation7 [shape = 'u8[131072]{0}', space=vmem, size = 0x20000, scoped, tag = 'input window, operand 2, single buffered']
    #allocation8 [shape = 'u8[16384]{0}', space=vmem, size = 0x4000, scoped, tag = 'input window, operand 3, single buffered']
    #allocation9 [shape = 's32[1]{0}', space=sflag, size = 0x4, scoped, tag = 'scoped memory for tpu_custom_call.1']
    #allocation10 [shape = 'u8[262144]{0}', space=vmem, size = 0x40000, scoped, tag = 'input window, operand 5, single buffered']
    #allocation11 [shape = 'u8[65536]{0}', space=vmem, size = 0x10000, scoped, tag = 'input window, operand 7, single buffered']
    #allocation12 [shape = 's32[1]{0}', space=sflag, size = 0x4, scoped, tag = 'scoped memory for tpu_custom_call.1']
    #allocation13 [shape = 'u8[32768]{0}', space=vmem, size = 0x8000, scoped, tag = 'input window, operand 9, single buffered']
    #allocation14 [shape = 'u8[32768]{0}', space=vmem, size = 0x8000, scoped, tag = 'input window, operand 11, single buffered']
    #allocation15 [shape = 's32[1]{0}', space=sflag, size = 0x4, scoped, tag = 'scoped memory for tpu_custom_call.1']
    #allocation16 [shape = 'u8[4096]{0}', space=vmem, size = 0x1000, scoped, tag = 'output window, operand 0, single buffered']
    %18 = vsyncpa [#allocation3], 0
    %19 = vsyncpa [#allocation6], 0
    %20 = vsyncpa [#allocation9], 0
    %21 = vsyncpa [#allocation12], 0
    %22 = vsyncpa [#allocation15], 0
    %23 = vsyncpa [#allocation4], 0
    // Predicated region
    $region2: #{tpu_custom_call.1} parent=1 // pred_check
      _
    $region3: #{tpu_custom_call.1} parent=1 // pred_check_branch
      %25 = sbr.rel (0) target = $region5
    $region4: #{tpu_custom_call.1} parent=1 // pred_region
      %s27 = ssub.s32 256, 256
      %28 = vsyncadd [#allocation3], %s27
      %s29 = sshll.u32 [#allocation2], 4
      %s30 = int_to_ptr.vmem [resolvable:$true] %s29
      %35 = dma.hbm_to_vmem [thread:$0]  %s0, 256, %s30, [#allocation3], 128, 128, 8
    $region5: #{tpu_custom_call.1} parent=1 // pred_fallthru
      _
    // Predicated region
    $region6: #{tpu_custom_call.1} parent=1 // pred_check
      _
    $region7: #{tpu_custom_call.1} parent=1 // pred_check_branch
      %37 = sbr.rel (0) target = $region9
    $region8: #{tpu_custom_call.1} parent=1 // pred_region
      %s39 = ssub.s32 128, 128
      %40 = vsyncadd [#allocation6], %s39
      %s41 = sshll.u32 [#allocation5], 4
      %s42 = int_to_ptr.vmem [resolvable:$true] %s41
      %47 = dma.hbm_to_vmem [thread:$0]  %s1, 128, %s42, [#allocation6], 64, 64, 4
    $region9: #{tpu_custom_call.1} parent=1 // pred_fallthru
      _
    // Predicated region
    $region10: #{tpu_custom_call.1} parent=1 // pred_check
      _
    $region11: #{tpu_custom_call.1} parent=1 // pred_check_branch
      %49 = sbr.rel (0) target = $region13
    $region12: #{tpu_custom_call.1} parent=1 // pred_region
      %s51 = ssub.s32 4096, 4096
      %52 = vsyncadd [#allocation6], %s51
      %s53 = sshll.u32 [#allocation7], 4
      %s54 = int_to_ptr.vmem [resolvable:$true] %s53
      %59 = dma.hbm_to_vmem [thread:$0]  %s2, 4096, %s54, [#allocation6], 256, 256, 16
    $region13: #{tpu_custom_call.1} parent=1 // pred_fallthru
      _
    // Predicated region
    $region14: #{tpu_custom_call.1} parent=1 // pred_check
      _
    $region15: #{tpu_custom_call.1} parent=1 // pred_check_branch
      %61 = sbr.rel (0) target = $region17
    $region16: #{tpu_custom_call.1} parent=1 // pred_region
      %s63 = ssub.s32 512, 512
      %64 = vsyncadd [#allocation9], %s63
      %s65 = sshll.u32 [#allocation8], 4
      %s66 = int_to_ptr.vmem [resolvable:$true] %s65
      %71 = dma.hbm_to_vmem [thread:$0]  %s3, 512, %s66, [#allocation9], 256, 256, 16
    $region17: #{tpu_custom_call.1} parent=1 // pred_fallthru
      _
    // Predicated region
    $region18: #{tpu_custom_call.1} parent=1 // pred_check
      _
    $region19: #{tpu_custom_call.1} parent=1 // pred_check_branch
      %73 = sbr.rel (0) target = $region21
    $region20: #{tpu_custom_call.1} parent=1 // pred_region
      _
    $region21: #{tpu_custom_call.1} parent=1 // pred_fallthru
      _
    // Predicated region
    $region22: #{tpu_custom_call.1} parent=1 // pred_check
      _
    $region23: #{tpu_custom_call.1} parent=1 // pred_check_branch
      %75 = sbr.rel (0) target = $region25
    $region24: #{tpu_custom_call.1} parent=1 // pred_region
      %s77 = ssub.s32 8192, 8192
      %78 = vsyncadd [#allocation9], %s77
      %s79 = sshll.u32 [#allocation10], 4
      %s80 = int_to_ptr.vmem [resolvable:$true] %s79
      %85 = dma.hbm_to_vmem [thread:$0]  %s5, 8192, %s80, [#allocation9], 128, 128, 8
    $region25: #{tpu_custom_call.1} parent=1 // pred_fallthru
      _
    // Predicated region
    $region26: #{tpu_custom_call.1} parent=1 // pred_check
      _
    $region27: #{tpu_custom_call.1} parent=1 // pred_check_branch
      %87 = sbr.rel (0) target = $region29
    $region28: #{tpu_custom_call.1} parent=1 // pred_region
      _
    $region29: #{tpu_custom_call.1} parent=1 // pred_fallthru
      _
    // Predicated region
    $region30: #{tpu_custom_call.1} parent=1 // pred_check
      _
    $region31: #{tpu_custom_call.1} parent=1 // pred_check_branch
      %89 = sbr.rel (0) target = $region33
    $region32: #{tpu_custom_call.1} parent=1 // pred_region
      %s91 = ssub.s32 2048, 2048
      %92 = vsyncadd [#allocation12], %s91
      %s93 = sshll.u32 [#allocation11], 4
      %s94 = int_to_ptr.vmem [resolvable:$true] %s93
      %99 = dma.hbm_to_vmem [thread:$0]  %s7, 2048, %s94, [#allocation12], 64, 64, 4
    $region33: #{tpu_custom_call.1} parent=1 // pred_fallthru
      _
    // Predicated region
    $region34: #{tpu_custom_call.1} parent=1 // pred_check
      _
    $region35: #{tpu_custom_call.1} parent=1 // pred_check_branch
      %101 = sbr.rel (0) target = $region37
    $region36: #{tpu_custom_call.1} parent=1 // pred_region
      _
    $region37: #{tpu_custom_call.1} parent=1 // pred_fallthru
      _
    // Predicated region
    $region38: #{tpu_custom_call.1} parent=1 // pred_check
      _
    $region39: #{tpu_custom_call.1} parent=1 // pred_check_branch
      %103 = sbr.rel (0) target = $region41
    $region40: #{tpu_custom_call.1} parent=1 // pred_region
      %s105 = ssub.s32 1024, 1024
      %106 = vsyncadd [#allocation12], %s105
      %s107 = sshll.u32 [#allocation13], 4
      %s108 = int_to_ptr.vmem [resolvable:$true] %s107
      %113 = dma.hbm_to_vmem [thread:$0]  %s9, 1024, %s108, [#allocation12], 64, 64, 4
    $region41: #{tpu_custom_call.1} parent=1 // pred_fallthru
      _
    // Predicated region
    $region42: #{tpu_custom_call.1} parent=1 // pred_check
      _
    $region43: #{tpu_custom_call.1} parent=1 // pred_check_branch
      %115 = sbr.rel (0) target = $region45
    $region44: #{tpu_custom_call.1} parent=1 // pred_region
      _
    $region45: #{tpu_custom_call.1} parent=1 // pred_fallthru
      _
    // Predicated region
    $region46: #{tpu_custom_call.1} parent=1 // pred_check
      _
    $region47: #{tpu_custom_call.1} parent=1 // pred_check_branch
      %117 = sbr.rel (0) target = $region49
    $region48: #{tpu_custom_call.1} parent=1 // pred_region
      %s119 = ssub.s32 1024, 1024
      %120 = vsyncadd [#allocation15], %s119
      %s121 = sshll.u32 [#allocation14], 4
      %s122 = int_to_ptr.vmem [resolvable:$true] %s121
      %127 = dma.hbm_to_vmem [thread:$0]  %s11, 1024, %s122, [#allocation15], 64, 64, 4
    $region49: #{tpu_custom_call.1} parent=1 // pred_fallthru
      _
    // Predicated region
    $region50: #{tpu_custom_call.1} parent=1 // pred_check
      _
    $region51: #{tpu_custom_call.1} parent=1 // pred_check_branch
      %129 = sbr.rel (0) target = $region53
    $region52: #{tpu_custom_call.1} parent=1 // pred_region
      _
    $region53: #{tpu_custom_call.1} parent=1 // pred_fallthru
      _
    // Predicated region
    $region54: #{tpu_custom_call.1} parent=1 // pred_check
      _
    $region55: #{tpu_custom_call.1} parent=1 // pred_check_branch
      %131 = sbr.rel (0) target = $region57
    $region56: #{tpu_custom_call.1} parent=1 // pred_region
      %132 = dma.done [#allocation3], 256
    $region57: #{tpu_custom_call.1} parent=1 // pred_fallthru
      _
    // Predicated region
    $region58: #{tpu_custom_call.1} parent=1 // pred_check
      _
    $region59: #{tpu_custom_call.1} parent=1 // pred_check_branch
      %134 = sbr.rel (0) target = $region61
    $region60: #{tpu_custom_call.1} parent=1 // pred_region
      %135 = dma.done [#allocation6], 128
    $region61: #{tpu_custom_call.1} parent=1 // pred_fallthru
      _
    // Predicated region
    $region62: #{tpu_custom_call.1} parent=1 // pred_check
      _
    $region63: #{tpu_custom_call.1} parent=1 // pred_check_branch
      %137 = sbr.rel (0) target = $region65
    $region64: #{tpu_custom_call.1} parent=1 // pred_region
      %138 = dma.done [#allocation6], 4096
    $region65: #{tpu_custom_call.1} parent=1 // pred_fallthru
      _
    // Predicated region
    $region66: #{tpu_custom_call.1} parent=1 // pred_check
      _
    $region67: #{tpu_custom_call.1} parent=1 // pred_check_branch
      %140 = sbr.rel (0) target = $region69
    $region68: #{tpu_custom_call.1} parent=1 // pred_region
      %141 = dma.done [#allocation9], 512
    $region69: #{tpu_custom_call.1} parent=1 // pred_fallthru
      _
    // Predicated region
    $region70: #{tpu_custom_call.1} parent=1 // pred_check
      _
    $region71: #{tpu_custom_call.1} parent=1 // pred_check_branch
      %143 = sbr.rel (0) target = $region73
    $region72: #{tpu_custom_call.1} parent=1 // pred_region
      %144 = dma.done [#allocation9], 8192
    $region73: #{tpu_custom_call.1} parent=1 // pred_fallthru
      _
    // Predicated region
    $region74: #{tpu_custom_call.1} parent=1 // pred_check
      _
    $region75: #{tpu_custom_call.1} parent=1 // pred_check_branch
      %146 = sbr.rel (0) target = $region77
    $region76: #{tpu_custom_call.1} parent=1 // pred_region
      %147 = dma.done [#allocation12], 2048
    $region77: #{tpu_custom_call.1} parent=1 // pred_fallthru
      _
    // Predicated region
    $region78: #{tpu_custom_call.1} parent=1 // pred_check
      _
    $region79: #{tpu_custom_call.1} parent=1 // pred_check_branch
      %149 = sbr.rel (0) target = $region81
    $region80: #{tpu_custom_call.1} parent=1 // pred_region
      %150 = dma.done [#allocation12], 1024
    $region81: #{tpu_custom_call.1} parent=1 // pred_fallthru
      _
    // Predicated region
    $region82: #{tpu_custom_call.1} parent=1 // pred_check
      _
    $region83: #{tpu_custom_call.1} parent=1 // pred_check_branch
      %152 = sbr.rel (0) target = $region85
    $region84: #{tpu_custom_call.1} parent=1 // pred_region
      %153 = dma.done [#allocation15], 1024
    $region85: #{tpu_custom_call.1} parent=1 // pred_fallthru
      _
    %v155 = vld [vmem:[#allocation2] sm:$0xff]
    %v156 = vld [vmem:[#allocation2 + $0x8] sm:$0xff]
    %v157 = vlaneseq
    %v158 = vand.u32 %v157, 127
    %159 = vset.pattern.permute.xlu0 0
    %160 = vperm.xlu0 %159, %v155
    %v161 = vpop.permute.xlu0 %160
    %162 = vset.pattern.permute.xlu0 0
    %163 = vperm.xlu0 %162, %v156
    %v164 = vpop.permute.xlu0 %163
    %vm165 = vcmp.eq.s32.totalorder %v158, %v161
    %vm166 = vcmp.eq.s32.totalorder %v158, %v164
    %v167 = vsel %vm165, 1, 0
    %v168 = vsel %vm166, 1, 0
    %v169 = vcvt.s32.f32 %v167
    %v170 = vcvt.s32.f32 %v168
    %v171 = vadd.s32 %v155, 12
    %v172 = vadd.s32 %v156, 12
    %173 = vset.pattern.permute.xlu0 1
    %174 = vperm.xlu0 %173, %v171
    %v175 = vpop.permute.xlu0 %174
    %176 = vset.pattern.permute.xlu0 1
    %177 = vperm.xlu0 %176, %v172
    %v178 = vpop.permute.xlu0 %177
    %vm179 = vcmp.eq.s32.totalorder %v158, %v175
    %vm180 = vcmp.eq.s32.totalorder %v158, %v178
    %v181 = vsel %vm179, 1, 0
    %v182 = vsel %vm180, 1, 0
    %v183 = vcvt.s32.f32 %v181
    %v184 = vcvt.s32.f32 %v182
    %v185 = vadd.f32 %v169, %v183
    %v186 = vadd.f32 %v170, %v184
    %v187 = vadd.s32 %v155, 21
    %v188 = vadd.s32 %v156, 21
    %189 = vset.pattern.permute.xlu0 2
    %190 = vperm.xlu0 %189, %v187
    %v191 = vpop.permute.xlu0 %190
    %192 = vset.pattern.permute.xlu0 2
    %193 = vperm.xlu0 %192, %v188
    %v194 = vpop.permute.xlu0 %193
    %vm195 = vcmp.eq.s32.totalorder %v158, %v191
    %vm196 = vcmp.eq.s32.totalorder %v158, %v194
    %v197 = vsel %vm195, 1, 0
    %v198 = vsel %vm196, 1, 0
    %v199 = vcvt.s32.f32 %v197
    %v200 = vcvt.s32.f32 %v198
    %v201 = vadd.f32 %v185, %v199
    %v202 = vadd.f32 %v186, %v200
    %v203 = vadd.s32 %v155, 24
    %v204 = vadd.s32 %v156, 24
    %205 = vset.pattern.permute.xlu0 3
    %206 = vperm.xlu0 %205, %v203
    %v207 = vpop.permute.xlu0 %206
    %208 = vset.pattern.permute.xlu0 3
    %209 = vperm.xlu0 %208, %v204
    %v210 = vpop.permute.xlu0 %209
    %vm211 = vcmp.eq.s32.totalorder %v158, %v207
    %vm212 = vcmp.eq.s32.totalorder %v158, %v210
    %v213 = vsel %vm211, 1, 0
    %v214 = vsel %vm212, 1, 0
    %v215 = vcvt.s32.f32 %v213
    %v216 = vcvt.s32.f32 %v214
    %v217 = vadd.f32 %v201, %v215
    %v218 = vadd.f32 %v202, %v216
    %v219 = vadd.s32 %v155, 31
    %v220 = vadd.s32 %v156, 31
    %221 = vset.pattern.permute.xlu0 4
    %222 = vperm.xlu0 %221, %v219
    %v223 = vpop.permute.xlu0 %222
    %224 = vset.pattern.permute.xlu0 4
    %225 = vperm.xlu0 %224, %v220
    %v226 = vpop.permute.xlu0 %225
    %vm227 = vcmp.eq.s32.totalorder %v158, %v223
    %vm228 = vcmp.eq.s32.totalorder %v158, %v226
    %v229 = vsel %vm227, 1, 0
    %v230 = vsel %vm228, 1, 0
    %v231 = vcvt.s32.f32 %v229
    %v232 = vcvt.s32.f32 %v230
    %v233 = vadd.f32 %v217, %v231
    %v234 = vadd.f32 %v218, %v232
    %v235 = vadd.s32 %v155, 38
    %v236 = vadd.s32 %v156, 38
    %237 = vset.pattern.permute.xlu0 5
    %238 = vperm.xlu0 %237, %v235
    %v239 = vpop.permute.xlu0 %238
    %240 = vset.pattern.permute.xlu0 5
    %241 = vperm.xlu0 %240, %v236
    %v242 = vpop.permute.xlu0 %241
    %vm243 = vcmp.eq.s32.totalorder %v158, %v239
    %vm244 = vcmp.eq.s32.totalorder %v158, %v242
    %v245 = vsel %vm243, 1, 0
    %v246 = vsel %vm244, 1, 0
    %v247 = vcvt.s32.f32 %v245
    %v248 = vcvt.s32.f32 %v246
    %v249 = vadd.f32 %v233, %v247
    %v250 = vadd.f32 %v234, %v248
    %v251 = vadd.s32 %v155, 45
    %v252 = vadd.s32 %v156, 45
    %253 = vset.pattern.permute.xlu0 6
    %254 = vperm.xlu0 %253, %v251
    %v255 = vpop.permute.xlu0 %254
    %256 = vset.pattern.permute.xlu0 6
    %257 = vperm.xlu0 %256, %v252
    %v258 = vpop.permute.xlu0 %257
    %vm259 = vcmp.eq.s32.totalorder %v158, %v255
    %vm260 = vcmp.eq.s32.totalorder %v158, %v258
    %v261 = vsel %vm259, 1, 0
    %v262 = vsel %vm260, 1, 0
    %v263 = vcvt.s32.f32 %v261
    %v264 = vcvt.s32.f32 %v262
    %v265 = vadd.f32 %v249, %v263
    %v266 = vadd.f32 %v250, %v264
    %v267 = vadd.s32 %v155, 60
    %v268 = vadd.s32 %v156, 60
    %269 = vset.pattern.permute.xlu0 7
    %270 = vperm.xlu0 %269, %v267
    %v271 = vpop.permute.xlu0 %270
    %272 = vset.pattern.permute.xlu0 7
    %273 = vperm.xlu0 %272, %v268
    %v274 = vpop.permute.xlu0 %273
    %vm275 = vcmp.eq.s32.totalorder %v158, %v271
    %vm276 = vcmp.eq.s32.totalorder %v158, %v274
    %v277 = vsel %vm275, 1, 0
    %v278 = vsel %vm276, 1, 0
    %v279 = vcvt.s32.f32 %v277
    %v280 = vcvt.s32.f32 %v278
    %v281 = vadd.f32 %v265, %v279
    %v282 = vadd.f32 %v266, %v280
    %v283 = vadd.s32 %v155, 80
    %v284 = vadd.s32 %v156, 80
    %285 = vset.pattern.permute.xlu0 8
    %286 = vperm.xlu0 %285, %v283
    %v287 = vpop.permute.xlu0 %286
    %288 = vset.pattern.permute.xlu0 8
    %289 = vperm.xlu0 %288, %v284
    %v290 = vpop.permute.xlu0 %289
    %vm291 = vcmp.eq.s32.totalorder %v158, %v287
    %vm292 = vcmp.eq.s32.totalorder %v158, %v290
    %v293 = vsel %vm291, 1, 0
    %v294 = vsel %vm292, 1, 0
    %v295 = vcvt.s32.f32 %v293
    %v296 = vcvt.s32.f32 %v294
    %v297 = vadd.f32 %v281, %v295
    %v298 = vadd.f32 %v282, %v296
    %v299 = vadd.s32 %v155, 90
    %v300 = vadd.s32 %v156, 90
    %301 = vset.pattern.permute.xlu0 9
    %302 = vperm.xlu0 %301, %v299
    %v303 = vpop.permute.xlu0 %302
    %304 = vset.pattern.permute.xlu0 9
    %305 = vperm.xlu0 %304, %v300
    %v306 = vpop.permute.xlu0 %305
    %vm307 = vcmp.eq.s32.totalorder %v158, %v303
    %vm308 = vcmp.eq.s32.totalorder %v158, %v306
    %v309 = vsel %vm307, 1, 0
    %v310 = vsel %vm308, 1, 0
    %v311 = vcvt.s32.f32 %v309
    %v312 = vcvt.s32.f32 %v310
    %v313 = vadd.f32 %v297, %v311
    %v314 = vadd.f32 %v298, %v312
    %v315 = vpack.c.bf16 %v314, %v313
    %v316 = vld [vmem:[#allocation7] sm:$0xff]
    %v317 = vld [vmem:[#allocation7 + $0x8] sm:$0xff]
    %v318 = vld [vmem:[#allocation7 + $0x10] sm:$0xff]
    %v319 = vld [vmem:[#allocation7 + $0x18] sm:$0xff]
    %v320 = vld [vmem:[#allocation7 + $0x20] sm:$0xff]
    %v321 = vld [vmem:[#allocation7 + $0x28] sm:$0xff]
    %v322 = vld [vmem:[#allocation7 + $0x30] sm:$0xff]
    %v323 = vld [vmem:[#allocation7 + $0x38] sm:$0xff]
    %v324 = vld [vmem:[#allocation7 + $0x40] sm:$0xff]
    %v325 = vld [vmem:[#allocation7 + $0x48] sm:$0xff]
    %v326 = vld [vmem:[#allocation7 + $0x50] sm:$0xff]
    %v327 = vld [vmem:[#allocation7 + $0x58] sm:$0xff]
    %v328 = vld [vmem:[#allocation7 + $0x60] sm:$0xff]
    %v329 = vld [vmem:[#allocation7 + $0x68] sm:$0xff]
    %v330 = vld [vmem:[#allocation7 + $0x70] sm:$0xff]
    %v331 = vld [vmem:[#allocation7 + $0x78] sm:$0xff]
    %v332 = vld [vmem:[#allocation7 + $0x80] sm:$0xff]
    %v333 = vld [vmem:[#allocation7 + $0x88] sm:$0xff]
    %v334 = vld [vmem:[#allocation7 + $0x90] sm:$0xff]
    %v335 = vld [vmem:[#allocation7 + $0x98] sm:$0xff]
    %v336 = vld [vmem:[#allocation7 + $0xa0] sm:$0xff]
    %v337 = vld [vmem:[#allocation7 + $0xa8] sm:$0xff]
    %v338 = vld [vmem:[#allocation7 + $0xb0] sm:$0xff]
    %v339 = vld [vmem:[#allocation7 + $0xb8] sm:$0xff]
    %v340 = vld [vmem:[#allocation7 + $0xc0] sm:$0xff]
    %v341 = vld [vmem:[#allocation7 + $0xc8] sm:$0xff]
    %v342 = vld [vmem:[#allocation7 + $0xd0] sm:$0xff]
    %v343 = vld [vmem:[#allocation7 + $0xd8] sm:$0xff]
    %v344 = vld [vmem:[#allocation7 + $0xe0] sm:$0xff]
    %v345 = vld [vmem:[#allocation7 + $0xe8] sm:$0xff]
    %v346 = vld [vmem:[#allocation7 + $0xf0] sm:$0xff]
    %v347 = vld [vmem:[#allocation7 + $0xf8] sm:$0xff]
    %v348 = vld [vmem:[#allocation5] sm:$0xf]
    %v349 = vld [vmem:[#allocation5 + $0x4] sm:$0xf]
    %v350 = vld [vmem:[#allocation8] sm:$0xff]
    %v351 = vld [vmem:[#allocation8 + $0x8] sm:$0xff]
    %v352 = vld [vmem:[#allocation8 + $0x10] sm:$0xff]
    %v353 = vld [vmem:[#allocation8 + $0x18] sm:$0xff]
    %v356 = vunpack.c.l.b16 %v348
    %v357 = vunpack.c.l.b16 %v349
    %v358 = vpack.c.b16 %v357, %v356
    %v363 = vunpack.c.l.b16 %v350
    %v364 = vunpack.c.h.b16 %v350
    %v365 = vunpack.c.l.b16 %v351
    %v366 = vunpack.c.h.b16 %v351
    %v367 = vunpack.c.l.b16 %v352
    %v368 = vunpack.c.h.b16 %v352
    %v369 = vunpack.c.l.b16 %v353
    %v370 = vunpack.c.h.b16 %v353
    %v371 = vpack.c.b16 %v367, %v363
    %v372 = vpack.c.b16 %v368, %v364
    %v373 = vpack.c.b16 %v369, %v365
    %v374 = vpack.c.b16 %v370, %v366
    %vm379 = vcmask 130048
    %v381 = vsel %vm379, %v358, 0
    %383 = vmatprep.subr.bf16.mxu0 %v372
    %384 = vmatpush1.bf16.msra.mxu0 %v371
    %385 = vmatprep.subr.bf16.mxu0 0
    %386 = vmatpush1.bf16.msra.mxu0 0
    %387 = vmatprep.subr.bf16.mxu0 0
    %388 = vmatpush1.bf16.msra.mxu0 0
    %389 = vmatprep.subr.bf16.mxu0 0
    %390 = vmatpush1.bf16.msra.mxu0 0
    %391 = vmatprep.subr.bf16.mxu0 0
    %392 = vmatpush1.bf16.msra.mxu0 0
    %393 = vmatprep.subr.bf16.mxu0 0
    %394 = vmatpush1.bf16.msra.mxu0 0
    %395 = vmatprep.subr.bf16.mxu0 0
    %396 = vmatpush1.bf16.msra.mxu0 0
    %397 = vmatprep.subr.bf16.mxu0 0
    %398 = vmatpush1.bf16.msra.mxu0 0
    %399 = vmatprep.subr.bf16.mxu0 0
    %400 = vmatpush1.bf16.msra.mxu0 0
    %401 = vmatprep.subr.bf16.mxu0 0
    %402 = vmatpush1.bf16.msra.mxu0 0
    %403 = vmatprep.subr.bf16.mxu0 0
    %404 = vmatpush1.bf16.msra.mxu0 0
    %405 = vmatprep.subr.bf16.mxu0 0
    %406 = vmatpush1.bf16.msra.mxu0 0
    %407 = vmatprep.subr.bf16.mxu0 0
    %408 = vmatpush1.bf16.msra.mxu0 0
    %409 = vmatprep.subr.bf16.mxu0 0
    %410 = vmatpush1.bf16.msra.mxu0 0
    %411 = vmatprep.subr.bf16.mxu0 0
    %412 = vmatpush1.bf16.msra.mxu0 0
    %413 = vmatprep.subr.bf16.mxu0 0
    %414 = vmatpush1.bf16.msra.mxu0 0
    %415 = vmatprep.mubr.bf16.mxu0 0
    %416 = vmatmul.mubr.bf16.gmra.mrb[0].mxu0 %v381
    %v417 = vpop.f32.mrb[0].mxu0
    %v418 = vadd.f32 0.0, %v417
    %v419 = vpop.f32.mrb[0].mxu0
    %v420 = vadd.f32 0.0, %v419
    %v421 = vpop.f32.mrb[0].mxu0
    %v422 = vadd.f32 0.0, %v421
    %v423 = vpop.f32.mrb[0].mxu0
    %v424 = vadd.f32 0.0, %v423
    %425 = vdwg.mxu0
    %426 = vmatprep.subr.bf16.mxu0 %v374
    %427 = vmatpush1.bf16.msra.mxu0 %v373
    %428 = vmatprep.subr.bf16.mxu0 0
    %429 = vmatpush1.bf16.msra.mxu0 0
    %430 = vmatprep.subr.bf16.mxu0 0
    %431 = vmatpush1.bf16.msra.mxu0 0
    %432 = vmatprep.subr.bf16.mxu0 0
    %433 = vmatpush1.bf16.msra.mxu0 0
    %434 = vmatprep.subr.bf16.mxu0 0
    %435 = vmatpush1.bf16.msra.mxu0 0
    %436 = vmatprep.subr.bf16.mxu0 0
    %437 = vmatpush1.bf16.msra.mxu0 0
    %438 = vmatprep.subr.bf16.mxu0 0
    %439 = vmatpush1.bf16.msra.mxu0 0
    %440 = vmatprep.subr.bf16.mxu0 0
    %441 = vmatpush1.bf16.msra.mxu0 0
    %442 = vmatprep.subr.bf16.mxu0 0
    %443 = vmatpush1.bf16.msra.mxu0 0
    %444 = vmatprep.subr.bf16.mxu0 0
    %445 = vmatpush1.bf16.msra.mxu0 0
    %446 = vmatprep.subr.bf16.mxu0 0
    %447 = vmatpush1.bf16.msra.mxu0 0
    %448 = vmatprep.subr.bf16.mxu0 0
    %449 = vmatpush1.bf16.msra.mxu0 0
    %450 = vmatprep.subr.bf16.mxu0 0
    %451 = vmatpush1.bf16.msra.mxu0 0
    %452 = vmatprep.subr.bf16.mxu0 0
    %453 = vmatpush1.bf16.msra.mxu0 0
    %454 = vmatprep.subr.bf16.mxu0 0
    %455 = vmatpush1.bf16.msra.mxu0 0
    %456 = vmatprep.subr.bf16.mxu0 0
    %457 = vmatpush1.bf16.msra.mxu0 0
    %458 = vmatprep.mubr.bf16.mxu0 0
    %459 = vmatmul.mubr.bf16.gmra.mrb[0].mxu0 %v381
    %v460 = vpop.f32.mrb[0].mxu0
    %v461 = vadd.f32 0.0, %v460
    %v462 = vpop.f32.mrb[0].mxu0
    %v463 = vadd.f32 0.0, %v462
    %v464 = vpop.f32.mrb[0].mxu0
    %v465 = vadd.f32 0.0, %v464
    %v466 = vpop.f32.mrb[0].mxu0
    %v467 = vadd.f32 0.0, %v466
    %468 = vdwg.mxu0
    %v501 = vunpack.c.l.b16 %v316
    %v502 = vunpack.c.h.b16 %v316
    %v503 = vunpack.c.l.b16 %v317
    %v504 = vunpack.c.h.b16 %v317
    %v505 = vunpack.c.l.b16 %v318
    %v506 = vunpack.c.h.b16 %v318
    %v507 = vunpack.c.l.b16 %v319
    %v508 = vunpack.c.h.b16 %v319
    %v509 = vunpack.c.l.b16 %v320
    %v510 = vunpack.c.h.b16 %v320
    %v511 = vunpack.c.l.b16 %v321
    %v512 = vunpack.c.h.b16 %v321
    %v513 = vunpack.c.l.b16 %v322
    %v514 = vunpack.c.h.b16 %v322
    %v515 = vunpack.c.l.b16 %v323
    %v516 = vunpack.c.h.b16 %v323
    %v517 = vunpack.c.l.b16 %v324
    %v518 = vunpack.c.h.b16 %v324
    %v519 = vunpack.c.l.b16 %v325
    %v520 = vunpack.c.h.b16 %v325
    %v521 = vunpack.c.l.b16 %v326
    %v522 = vunpack.c.h.b16 %v326
    %v523 = vunpack.c.l.b16 %v327
    %v524 = vunpack.c.h.b16 %v327
    %v525 = vunpack.c.l.b16 %v328
    %v526 = vunpack.c.h.b16 %v328
    %v527 = vunpack.c.l.b16 %v329
    %v528 = vunpack.c.h.b16 %v329
    %v529 = vunpack.c.l.b16 %v330
    %v530 = vunpack.c.h.b16 %v330
    %v531 = vunpack.c.l.b16 %v331
    %v532 = vunpack.c.h.b16 %v331
    %v533 = vunpack.c.l.b16 %v332
    %v534 = vunpack.c.h.b16 %v332
    %v535 = vunpack.c.l.b16 %v333
    %v536 = vunpack.c.h.b16 %v333
    %v537 = vunpack.c.l.b16 %v334
    %v538 = vunpack.c.h.b16 %v334
    %v539 = vunpack.c.l.b16 %v335
    %v540 = vunpack.c.h.b16 %v335
    %v541 = vunpack.c.l.b16 %v336
    %v542 = vunpack.c.h.b16 %v336
    %v543 = vunpack.c.l.b16 %v337
    %v544 = vunpack.c.h.b16 %v337
    %v545 = vunpack.c.l.b16 %v338
    %v546 = vunpack.c.h.b16 %v338
    %v547 = vunpack.c.l.b16 %v339
    %v548 = vunpack.c.h.b16 %v339
    %v549 = vunpack.c.l.b16 %v340
    %v550 = vunpack.c.h.b16 %v340
    %v551 = vunpack.c.l.b16 %v341
    %v552 = vunpack.c.h.b16 %v341
    %v553 = vunpack.c.l.b16 %v342
    %v554 = vunpack.c.h.b16 %v342
    %v555 = vunpack.c.l.b16 %v343
    %v556 = vunpack.c.h.b16 %v343
    %v557 = vunpack.c.l.b16 %v344
    %v558 = vunpack.c.h.b16 %v344
    %v559 = vunpack.c.l.b16 %v345
    %v560 = vunpack.c.h.b16 %v345
    %v561 = vunpack.c.l.b16 %v346
    %v562 = vunpack.c.h.b16 %v346
    %v563 = vunpack.c.l.b16 %v347
    %v564 = vunpack.c.h.b16 %v347
    %v565 = vpack.c.b16 %v505, %v501
    %v566 = vpack.c.b16 %v506, %v502
    %v567 = vpack.c.b16 %v507, %v503
    %v568 = vpack.c.b16 %v508, %v504
    %v569 = vpack.c.b16 %v513, %v509
    %v570 = vpack.c.b16 %v514, %v510
    %v571 = vpack.c.b16 %v515, %v511
    %v572 = vpack.c.b16 %v516, %v512
    %v573 = vpack.c.b16 %v521, %v517
    %v574 = vpack.c.b16 %v522, %v518
    %v575 = vpack.c.b16 %v523, %v519
    %v576 = vpack.c.b16 %v524, %v520
    %v577 = vpack.c.b16 %v529, %v525
    %v578 = vpack.c.b16 %v530, %v526
    %v579 = vpack.c.b16 %v531, %v527
    %v580 = vpack.c.b16 %v532, %v528
    %v581 = vpack.c.b16 %v537, %v533
    %v582 = vpack.c.b16 %v538, %v534
    %v583 = vpack.c.b16 %v539, %v535
    %v584 = vpack.c.b16 %v540, %v536
    %v585 = vpack.c.b16 %v545, %v541
    %v586 = vpack.c.b16 %v546, %v542
    %v587 = vpack.c.b16 %v547, %v543
    %v588 = vpack.c.b16 %v548, %v544
    %v589 = vpack.c.b16 %v553, %v549
    %v590 = vpack.c.b16 %v554, %v550
    %v591 = vpack.c.b16 %v555, %v551
    %v592 = vpack.c.b16 %v556, %v552
    %v593 = vpack.c.b16 %v561, %v557
    %v594 = vpack.c.b16 %v562, %v558
    %v595 = vpack.c.b16 %v563, %v559
    %v596 = vpack.c.b16 %v564, %v560
    %629 = vmatprep.subr.bf16.mxu0 %v566
    %630 = vmatpush1.bf16.msra.mxu0 %v565
    %631 = vmatprep.subr.bf16.mxu0 %v570
    %632 = vmatpush1.bf16.msra.mxu0 %v569
    %633 = vmatprep.subr.bf16.mxu0 %v574
    %634 = vmatpush1.bf16.msra.mxu0 %v573
    %635 = vmatprep.subr.bf16.mxu0 %v578
    %636 = vmatpush1.bf16.msra.mxu0 %v577
    %637 = vmatprep.subr.bf16.mxu0 %v582
    %638 = vmatpush1.bf16.msra.mxu0 %v581
    %639 = vmatprep.subr.bf16.mxu0 %v586
    %640 = vmatpush1.bf16.msra.mxu0 %v585
    %641 = vmatprep.subr.bf16.mxu0 %v590
    %642 = vmatpush1.bf16.msra.mxu0 %v589
    %643 = vmatprep.subr.bf16.mxu0 %v594
    %644 = vmatpush1.bf16.msra.mxu0 %v593
    %645 = vmatprep.subr.bf16.mxu0 0
    %646 = vmatpush1.bf16.msra.mxu0 0
    %647 = vmatprep.subr.bf16.mxu0 0
    %648 = vmatpush1.bf16.msra.mxu0 0
    %649 = vmatprep.subr.bf16.mxu0 0
    %650 = vmatpush1.bf16.msra.mxu0 0
    %651 = vmatprep.subr.bf16.mxu0 0
    %652 = vmatpush1.bf16.msra.mxu0 0
    %653 = vmatprep.subr.bf16.mxu0 0
    %654 = vmatpush1.bf16.msra.mxu0 0
    %655 = vmatprep.subr.bf16.mxu0 0
    %656 = vmatpush1.bf16.msra.mxu0 0
    %657 = vmatprep.subr.bf16.mxu0 0
    %658 = vmatpush1.bf16.msra.mxu0 0
    %659 = vmatprep.subr.bf16.mxu0 0
    %660 = vmatpush1.bf16.msra.mxu0 0
    %661 = vmatprep.mubr.bf16.mxu0 0
    %662 = vmatmul.mubr.bf16.gmra.mrb[0].mxu0 %v315
    %v663 = vpop.f32.mrb[0].mxu0
    %v664 = vadd.f32 %v418, %v663
    %v665 = vpop.f32.mrb[0].mxu0
    %v666 = vadd.f32 %v420, %v665
    %v667 = vpop.f32.mrb[0].mxu0
    %v668 = vadd.f32 %v422, %v667
    %v669 = vpop.f32.mrb[0].mxu0
    %v670 = vadd.f32 %v424, %v669
    %671 = vdwg.mxu0
    %672 = vmatprep.subr.bf16.mxu0 %v568
    %673 = vmatpush1.bf16.msra.mxu0 %v567
    %674 = vmatprep.subr.bf16.mxu0 %v572
    %675 = vmatpush1.bf16.msra.mxu0 %v571
    %676 = vmatprep.subr.bf16.mxu0 %v576
    %677 = vmatpush1.bf16.msra.mxu0 %v575
    %678 = vmatprep.subr.bf16.mxu0 %v580
    %679 = vmatpush1.bf16.msra.mxu0 %v579
    %680 = vmatprep.subr.bf16.mxu0 %v584
    %681 = vmatpush1.bf16.msra.mxu0 %v583
    %682 = vmatprep.subr.bf16.mxu0 %v588
    %683 = vmatpush1.bf16.msra.mxu0 %v587
    %684 = vmatprep.subr.bf16.mxu0 %v592
    %685 = vmatpush1.bf16.msra.mxu0 %v591
    %686 = vmatprep.subr.bf16.mxu0 %v596
    %687 = vmatpush1.bf16.msra.mxu0 %v595
    %688 = vmatprep.subr.bf16.mxu0 0
    %689 = vmatpush1.bf16.msra.mxu0 0
    %690 = vmatprep.subr.bf16.mxu0 0
    %691 = vmatpush1.bf16.msra.mxu0 0
    %692 = vmatprep.subr.bf16.mxu0 0
    %693 = vmatpush1.bf16.msra.mxu0 0
    %694 = vmatprep.subr.bf16.mxu0 0
    %695 = vmatpush1.bf16.msra.mxu0 0
    %696 = vmatprep.subr.bf16.mxu0 0
    %697 = vmatpush1.bf16.msra.mxu0 0
    %698 = vmatprep.subr.bf16.mxu0 0
    %699 = vmatpush1.bf16.msra.mxu0 0
    %700 = vmatprep.subr.bf16.mxu0 0
    %701 = vmatpush1.bf16.msra.mxu0 0
    %702 = vmatprep.subr.bf16.mxu0 0
    %703 = vmatpush1.bf16.msra.mxu0 0
    %704 = vmatprep.mubr.bf16.mxu0 0
    %705 = vmatmul.mubr.bf16.gmra.mrb[0].mxu0 %v315
    %v706 = vpop.f32.mrb[0].mxu0
    %v707 = vadd.f32 %v461, %v706
    %v708 = vpop.f32.mrb[0].mxu0
    %v709 = vadd.f32 %v463, %v708
    %v710 = vpop.f32.mrb[0].mxu0
    %v711 = vadd.f32 %v465, %v710
    %v712 = vpop.f32.mrb[0].mxu0
    %v713 = vadd.f32 %v467, %v712
    %714 = vdwg.mxu0
    %v715 = vld [vmem:[%s4] sm:$0xf]
    %v717 = vlaneseq
    %v718 = vshrl.u32 %v717, 7
    %v719 = vsub.s32 0, %v718
    %v720 = vrot.slane %v715, %v719
    %v721 = vlaneseq
    %v722 = vshrl.u32 %v721, 7
    %v723 = vsub.s32 1, %v722
    %v724 = vrot.slane %v715, %v723
    %v725 = vlaneseq
    %v726 = vshrl.u32 %v725, 7
    %v727 = vsub.s32 2, %v726
    %v728 = vrot.slane %v715, %v727
    %v729 = vlaneseq
    %v730 = vshrl.u32 %v729, 7
    %v731 = vsub.s32 3, %v730
    %v732 = vrot.slane %v715, %v731
    %v737 = vadd.f32 %v664, %v720
    %v738 = vadd.f32 %v666, %v724
    %v739 = vadd.f32 %v707, %v728
    %v740 = vadd.f32 %v709, %v732
    %v741 = vadd.f32 %v668, %v720
    %v742 = vadd.f32 %v670, %v724
    %v743 = vadd.f32 %v711, %v728
    %v744 = vadd.f32 %v713, %v732
    %v745 = vmax.f32 %v737, 0.0
    %v746 = vmax.f32 %v738, 0.0
    %v747 = vmax.f32 %v739, 0.0
    %v748 = vmax.f32 %v740, 0.0
    %v749 = vmax.f32 %v741, 0.0
    %v750 = vmax.f32 %v742, 0.0
    %v751 = vmax.f32 %v743, 0.0
    %v752 = vmax.f32 %v744, 0.0
    %v753 = vpack.c.bf16 %v749, %v745
    %v754 = vpack.c.bf16 %v750, %v746
    %v755 = vpack.c.bf16 %v751, %v747
    %v756 = vpack.c.bf16 %v752, %v748
    %v757 = vld [vmem:[#allocation10] sm:$0xff]
    %v758 = vld [vmem:[#allocation10 + $0x8] sm:$0xff]
    %v759 = vld [vmem:[#allocation10 + $0x10] sm:$0xff]
    %v760 = vld [vmem:[#allocation10 + $0x18] sm:$0xff]
    %v761 = vld [vmem:[#allocation10 + $0x20] sm:$0xff]
    %v762 = vld [vmem:[#allocation10 + $0x28] sm:$0xff]
    %v763 = vld [vmem:[#allocation10 + $0x30] sm:$0xff]
    %v764 = vld [vmem:[#allocation10 + $0x38] sm:$0xff]
    %v765 = vld [vmem:[#allocation10 + $0x40] sm:$0xff]
    %v766 = vld [vmem:[#allocation10 + $0x48] sm:$0xff]
    %v767 = vld [vmem:[#allocation10 + $0x50] sm:$0xff]
    %v768 = vld [vmem:[#allocation10 + $0x58] sm:$0xff]
    %v769 = vld [vmem:[#allocation10 + $0x60] sm:$0xff]
    %v770 = vld [vmem:[#allocation10 + $0x68] sm:$0xff]
    %v771 = vld [vmem:[#allocation10 + $0x70] sm:$0xff]
    %v772 = vld [vmem:[#allocation10 + $0x78] sm:$0xff]
    %v773 = vld [vmem:[#allocation10 + $0x80] sm:$0xff]
    %v774 = vld [vmem:[#allocation10 + $0x88] sm:$0xff]
    %v775 = vld [vmem:[#allocation10 + $0x90] sm:$0xff]
    %v776 = vld [vmem:[#allocation10 + $0x98] sm:$0xff]
    %v777 = vld [vmem:[#allocation10 + $0xa0] sm:$0xff]
    %v778 = vld [vmem:[#allocation10 + $0xa8] sm:$0xff]
    %v779 = vld [vmem:[#allocation10 + $0xb0] sm:$0xff]
    %v780 = vld [vmem:[#allocation10 + $0xb8] sm:$0xff]
    %v781 = vld [vmem:[#allocation10 + $0xc0] sm:$0xff]
    %v782 = vld [vmem:[#allocation10 + $0xc8] sm:$0xff]
    %v783 = vld [vmem:[#allocation10 + $0xd0] sm:$0xff]
    %v784 = vld [vmem:[#allocation10 + $0xd8] sm:$0xff]
    %v785 = vld [vmem:[#allocation10 + $0xe0] sm:$0xff]
    %v786 = vld [vmem:[#allocation10 + $0xe8] sm:$0xff]
    %v787 = vld [vmem:[#allocation10 + $0xf0] sm:$0xff]
    %v788 = vld [vmem:[#allocation10 + $0xf8] sm:$0xff]
    %v789 = vld [vmem:[#allocation10 + $0x100] sm:$0xff]
    %v790 = vld [vmem:[#allocation10 + $0x108] sm:$0xff]
    %v791 = vld [vmem:[#allocation10 + $0x110] sm:$0xff]
    %v792 = vld [vmem:[#allocation10 + $0x118] sm:$0xff]
    %v793 = vld [vmem:[#allocation10 + $0x120] sm:$0xff]
    %v794 = vld [vmem:[#allocation10 + $0x128] sm:$0xff]
    %v795 = vld [vmem:[#allocation10 + $0x130] sm:$0xff]
    %v796 = vld [vmem:[#allocation10 + $0x138] sm:$0xff]
    %v797 = vld [vmem:[#allocation10 + $0x140] sm:$0xff]
    %v798 = vld [vmem:[#allocation10 + $0x148] sm:$0xff]
    %v799 = vld [vmem:[#allocation10 + $0x150] sm:$0xff]
    %v800 = vld [vmem:[#allocation10 + $0x158] sm:$0xff]
    %v801 = vld [vmem:[#allocation10 + $0x160] sm:$0xff]
    %v802 = vld [vmem:[#allocation10 + $0x168] sm:$0xff]
    %v803 = vld [vmem:[#allocation10 + $0x170] sm:$0xff]
    %v804 = vld [vmem:[#allocation10 + $0x178] sm:$0xff]
    %v805 = vld [vmem:[#allocation10 + $0x180] sm:$0xff]
    %v806 = vld [vmem:[#allocation10 + $0x188] sm:$0xff]
    %v807 = vld [vmem:[#allocation10 + $0x190] sm:$0xff]
    %v808 = vld [vmem:[#allocation10 + $0x198] sm:$0xff]
    %v809 = vld [vmem:[#allocation10 + $0x1a0] sm:$0xff]
    %v810 = vld [vmem:[#allocation10 + $0x1a8] sm:$0xff]
    %v811 = vld [vmem:[#allocation10 + $0x1b0] sm:$0xff]
    %v812 = vld [vmem:[#allocation10 + $0x1b8] sm:$0xff]
    %v813 = vld [vmem:[#allocation10 + $0x1c0] sm:$0xff]
    %v814 = vld [vmem:[#allocation10 + $0x1c8] sm:$0xff]
    %v815 = vld [vmem:[#allocation10 + $0x1d0] sm:$0xff]
    %v816 = vld [vmem:[#allocation10 + $0x1d8] sm:$0xff]
    %v817 = vld [vmem:[#allocation10 + $0x1e0] sm:$0xff]
    %v818 = vld [vmem:[#allocation10 + $0x1e8] sm:$0xff]
    %v819 = vld [vmem:[#allocation10 + $0x1f0] sm:$0xff]
    %v820 = vld [vmem:[#allocation10 + $0x1f8] sm:$0xff]
    %v821 = vld [vmem:[%s6] sm:$0x3]
    %v823 = vlaneseq
    %v824 = vshrl.u32 %v823, 7
    %v825 = vsub.s32 0, %v824
    %v826 = vrot.slane %v821, %v825
    %v827 = vlaneseq
    %v828 = vshrl.u32 %v827, 7
    %v829 = vsub.s32 1, %v828
    %v830 = vrot.slane %v821, %v829
    %v897 = vunpack.c.l.b16 %v757
    %v898 = vunpack.c.h.b16 %v757
    %v899 = vunpack.c.l.b16 %v758
    %v900 = vunpack.c.h.b16 %v758
    %v901 = vunpack.c.l.b16 %v759
    %v902 = vunpack.c.h.b16 %v759
    %v903 = vunpack.c.l.b16 %v760
    %v904 = vunpack.c.h.b16 %v760
    %v905 = vunpack.c.l.b16 %v761
    %v906 = vunpack.c.h.b16 %v761
    %v907 = vunpack.c.l.b16 %v762
    %v908 = vunpack.c.h.b16 %v762
    %v909 = vunpack.c.l.b16 %v763
    %v910 = vunpack.c.h.b16 %v763
    %v911 = vunpack.c.l.b16 %v764
    %v912 = vunpack.c.h.b16 %v764
    %v913 = vunpack.c.l.b16 %v765
    %v914 = vunpack.c.h.b16 %v765
    %v915 = vunpack.c.l.b16 %v766
    %v916 = vunpack.c.h.b16 %v766
    %v917 = vunpack.c.l.b16 %v767
    %v918 = vunpack.c.h.b16 %v767
    %v919 = vunpack.c.l.b16 %v768
    %v920 = vunpack.c.h.b16 %v768
    %v921 = vunpack.c.l.b16 %v769
    %v922 = vunpack.c.h.b16 %v769
    %v923 = vunpack.c.l.b16 %v770
    %v924 = vunpack.c.h.b16 %v770
    %v925 = vunpack.c.l.b16 %v771
    %v926 = vunpack.c.h.b16 %v771
    %v927 = vunpack.c.l.b16 %v772
    %v928 = vunpack.c.h.b16 %v772
    %v929 = vunpack.c.l.b16 %v773
    %v930 = vunpack.c.h.b16 %v773
    %v931 = vunpack.c.l.b16 %v774
    %v932 = vunpack.c.h.b16 %v774
    %v933 = vunpack.c.l.b16 %v775
    %v934 = vunpack.c.h.b16 %v775
    %v935 = vunpack.c.l.b16 %v776
    %v936 = vunpack.c.h.b16 %v776
    %v937 = vunpack.c.l.b16 %v777
    %v938 = vunpack.c.h.b16 %v777
    %v939 = vunpack.c.l.b16 %v778
    %v940 = vunpack.c.h.b16 %v778
    %v941 = vunpack.c.l.b16 %v779
    %v942 = vunpack.c.h.b16 %v779
    %v943 = vunpack.c.l.b16 %v780
    %v944 = vunpack.c.h.b16 %v780
    %v945 = vunpack.c.l.b16 %v781
    %v946 = vunpack.c.h.b16 %v781
    %v947 = vunpack.c.l.b16 %v782
    %v948 = vunpack.c.h.b16 %v782
    %v949 = vunpack.c.l.b16 %v783
    %v950 = vunpack.c.h.b16 %v783
    %v951 = vunpack.c.l.b16 %v784
    %v952 = vunpack.c.h.b16 %v784
    %v953 = vunpack.c.l.b16 %v785
    %v954 = vunpack.c.h.b16 %v785
    %v955 = vunpack.c.l.b16 %v786
    %v956 = vunpack.c.h.b16 %v786
    %v957 = vunpack.c.l.b16 %v787
    %v958 = vunpack.c.h.b16 %v787
    %v959 = vunpack.c.l.b16 %v788
    %v960 = vunpack.c.h.b16 %v788
    %v961 = vunpack.c.l.b16 %v789
    %v962 = vunpack.c.h.b16 %v789
    %v963 = vunpack.c.l.b16 %v790
    %v964 = vunpack.c.h.b16 %v790
    %v965 = vunpack.c.l.b16 %v791
    %v966 = vunpack.c.h.b16 %v791
    %v967 = vunpack.c.l.b16 %v792
    %v968 = vunpack.c.h.b16 %v792
    %v969 = vunpack.c.l.b16 %v793
    %v970 = vunpack.c.h.b16 %v793
    %v971 = vunpack.c.l.b16 %v794
    %v972 = vunpack.c.h.b16 %v794
    %v973 = vunpack.c.l.b16 %v795
    %v974 = vunpack.c.h.b16 %v795
    %v975 = vunpack.c.l.b16 %v796
    %v976 = vunpack.c.h.b16 %v796
    %v977 = vunpack.c.l.b16 %v797
    %v978 = vunpack.c.h.b16 %v797
    %v979 = vunpack.c.l.b16 %v798
    %v980 = vunpack.c.h.b16 %v798
    %v981 = vunpack.c.l.b16 %v799
    %v982 = vunpack.c.h.b16 %v799
    %v983 = vunpack.c.l.b16 %v800
    %v984 = vunpack.c.h.b16 %v800
    %v985 = vunpack.c.l.b16 %v801
    %v986 = vunpack.c.h.b16 %v801
    %v987 = vunpack.c.l.b16 %v802
    %v988 = vunpack.c.h.b16 %v802
    %v989 = vunpack.c.l.b16 %v803
    %v990 = vunpack.c.h.b16 %v803
    %v991 = vunpack.c.l.b16 %v804
    %v992 = vunpack.c.h.b16 %v804
    %v993 = vunpack.c.l.b16 %v805
    %v994 = vunpack.c.h.b16 %v805
    %v995 = vunpack.c.l.b16 %v806
    %v996 = vunpack.c.h.b16 %v806
    %v997 = vunpack.c.l.b16 %v807
    %v998 = vunpack.c.h.b16 %v807
    %v999 = vunpack.c.l.b16 %v808
    %v1000 = vunpack.c.h.b16 %v808
    %v1001 = vunpack.c.l.b16 %v809
    %v1002 = vunpack.c.h.b16 %v809
    %v1003 = vunpack.c.l.b16 %v810
    %v1004 = vunpack.c.h.b16 %v810
    %v1005 = vunpack.c.l.b16 %v811
    %v1006 = vunpack.c.h.b16 %v811
    %v1007 = vunpack.c.l.b16 %v812
    %v1008 = vunpack.c.h.b16 %v812
    %v1009 = vunpack.c.l.b16 %v813
    %v1010 = vunpack.c.h.b16 %v813
    %v1011 = vunpack.c.l.b16 %v814
    %v1012 = vunpack.c.h.b16 %v814
    %v1013 = vunpack.c.l.b16 %v815
    %v1014 = vunpack.c.h.b16 %v815
    %v1015 = vunpack.c.l.b16 %v816
    %v1016 = vunpack.c.h.b16 %v816
    %v1017 = vunpack.c.l.b16 %v817
    %v1018 = vunpack.c.h.b16 %v817
    %v1019 = vunpack.c.l.b16 %v818
    %v1020 = vunpack.c.h.b16 %v818
    %v1021 = vunpack.c.l.b16 %v819
    %v1022 = vunpack.c.h.b16 %v819
    %v1023 = vunpack.c.l.b16 %v820
    %v1024 = vunpack.c.h.b16 %v820
    %v1025 = vpack.c.b16 %v899, %v897
    %v1026 = vpack.c.b16 %v900, %v898
    %v1027 = vpack.c.b16 %v903, %v901
    %v1028 = vpack.c.b16 %v904, %v902
    %v1029 = vpack.c.b16 %v907, %v905
    %v1030 = vpack.c.b16 %v908, %v906
    %v1031 = vpack.c.b16 %v911, %v909
    %v1032 = vpack.c.b16 %v912, %v910
    %v1033 = vpack.c.b16 %v915, %v913
    %v1034 = vpack.c.b16 %v916, %v914
    %v1035 = vpack.c.b16 %v919, %v917
    %v1036 = vpack.c.b16 %v920, %v918
    %v1037 = vpack.c.b16 %v923, %v921
    %v1038 = vpack.c.b16 %v924, %v922
    %v1039 = vpack.c.b16 %v927, %v925
    %v1040 = vpack.c.b16 %v928, %v926
    %v1041 = vpack.c.b16 %v931, %v929
    %v1042 = vpack.c.b16 %v932, %v930
    %v1043 = vpack.c.b16 %v935, %v933
    %v1044 = vpack.c.b16 %v936, %v934
    %v1045 = vpack.c.b16 %v939, %v937
    %v1046 = vpack.c.b16 %v940, %v938
    %v1047 = vpack.c.b16 %v943, %v941
    %v1048 = vpack.c.b16 %v944, %v942
    %v1049 = vpack.c.b16 %v947, %v945
    %v1050 = vpack.c.b16 %v948, %v946
    %v1051 = vpack.c.b16 %v951, %v949
    %v1052 = vpack.c.b16 %v952, %v950
    %v1053 = vpack.c.b16 %v955, %v953
    %v1054 = vpack.c.b16 %v956, %v954
    %v1055 = vpack.c.b16 %v959, %v957
    %v1056 = vpack.c.b16 %v960, %v958
    %v1057 = vpack.c.b16 %v963, %v961
    %v1058 = vpack.c.b16 %v964, %v962
    %v1059 = vpack.c.b16 %v967, %v965
    %v1060 = vpack.c.b16 %v968, %v966
    %v1061 = vpack.c.b16 %v971, %v969
    %v1062 = vpack.c.b16 %v972, %v970
    %v1063 = vpack.c.b16 %v975, %v973
    %v1064 = vpack.c.b16 %v976, %v974
    %v1065 = vpack.c.b16 %v979, %v977
    %v1066 = vpack.c.b16 %v980, %v978
    %v1067 = vpack.c.b16 %v983, %v981
    %v1068 = vpack.c.b16 %v984, %v982
    %v1069 = vpack.c.b16 %v987, %v985
    %v1070 = vpack.c.b16 %v988, %v986
    %v1071 = vpack.c.b16 %v991, %v989
    %v1072 = vpack.c.b16 %v992, %v990
    %v1073 = vpack.c.b16 %v995, %v993
    %v1074 = vpack.c.b16 %v996, %v994
    %v1075 = vpack.c.b16 %v999, %v997
    %v1076 = vpack.c.b16 %v1000, %v998
    %v1077 = vpack.c.b16 %v1003, %v1001
    %v1078 = vpack.c.b16 %v1004, %v1002
    %v1079 = vpack.c.b16 %v1007, %v1005
    %v1080 = vpack.c.b16 %v1008, %v1006
    %v1081 = vpack.c.b16 %v1011, %v1009
    %v1082 = vpack.c.b16 %v1012, %v1010
    %v1083 = vpack.c.b16 %v1015, %v1013
    %v1084 = vpack.c.b16 %v1016, %v1014
    %v1085 = vpack.c.b16 %v1019, %v1017
    %v1086 = vpack.c.b16 %v1020, %v1018
    %v1087 = vpack.c.b16 %v1023, %v1021
    %v1088 = vpack.c.b16 %v1024, %v1022
    %1153 = vmatprep.subr.bf16.mxu0 %v1026
    %1154 = vmatpush1.bf16.msra.mxu0 %v1025
    %1155 = vmatprep.subr.bf16.mxu0 %v1028
    %1156 = vmatpush1.bf16.msra.mxu0 %v1027
    %1157 = vmatprep.subr.bf16.mxu0 %v1030
    %1158 = vmatpush1.bf16.msra.mxu0 %v1029
    %1159 = vmatprep.subr.bf16.mxu0 %v1032
    %1160 = vmatpush1.bf16.msra.mxu0 %v1031
    %1161 = vmatprep.subr.bf16.mxu0 %v1034
    %1162 = vmatpush1.bf16.msra.mxu0 %v1033
    %1163 = vmatprep.subr.bf16.mxu0 %v1036
    %1164 = vmatpush1.bf16.msra.mxu0 %v1035
    %1165 = vmatprep.subr.bf16.mxu0 %v1038
    %1166 = vmatpush1.bf16.msra.mxu0 %v1037
    %1167 = vmatprep.subr.bf16.mxu0 %v1040
    %1168 = vmatpush1.bf16.msra.mxu0 %v1039
    %1169 = vmatprep.subr.bf16.mxu0 %v1042
    %1170 = vmatpush1.bf16.msra.mxu0 %v1041
    %1171 = vmatprep.subr.bf16.mxu0 %v1044
    %1172 = vmatpush1.bf16.msra.mxu0 %v1043
    %1173 = vmatprep.subr.bf16.mxu0 %v1046
    %1174 = vmatpush1.bf16.msra.mxu0 %v1045
    %1175 = vmatprep.subr.bf16.mxu0 %v1048
    %1176 = vmatpush1.bf16.msra.mxu0 %v1047
    %1177 = vmatprep.subr.bf16.mxu0 %v1050
    %1178 = vmatpush1.bf16.msra.mxu0 %v1049
    %1179 = vmatprep.subr.bf16.mxu0 %v1052
    %1180 = vmatpush1.bf16.msra.mxu0 %v1051
    %1181 = vmatprep.subr.bf16.mxu0 %v1054
    %1182 = vmatpush1.bf16.msra.mxu0 %v1053
    %1183 = vmatprep.subr.bf16.mxu0 %v1056
    %1184 = vmatpush1.bf16.msra.mxu0 %v1055
    %1185 = vmatprep.mubr.bf16.mxu0 %v754
    %1186 = vmatmul.mubr.bf16.gmra.mrb[0].mxu0 %v753
    %v1187 = vpop.f32.mrb[0].mxu0
    %v1188 = vadd.f32 %v826, %v1187
    %v1189 = vpop.f32.mrb[0].mxu0
    %v1190 = vadd.f32 %v830, %v1189
    %v1191 = vpop.f32.mrb[0].mxu0
    %v1192 = vadd.f32 %v826, %v1191
    %v1193 = vpop.f32.mrb[0].mxu0
    %v1194 = vadd.f32 %v830, %v1193
    %1195 = vdwg.mxu0
    %1196 = vmatprep.subr.bf16.mxu0 %v1058
    %1197 = vmatpush1.bf16.msra.mxu0 %v1057
    %1198 = vmatprep.subr.bf16.mxu0 %v1060
    %1199 = vmatpush1.bf16.msra.mxu0 %v1059
    %1200 = vmatprep.subr.bf16.mxu0 %v1062
    %1201 = vmatpush1.bf16.msra.mxu0 %v1061
    %1202 = vmatprep.subr.bf16.mxu0 %v1064
    %1203 = vmatpush1.bf16.msra.mxu0 %v1063
    %1204 = vmatprep.subr.bf16.mxu0 %v1066
    %1205 = vmatpush1.bf16.msra.mxu0 %v1065
    %1206 = vmatprep.subr.bf16.mxu0 %v1068
    %1207 = vmatpush1.bf16.msra.mxu0 %v1067
    %1208 = vmatprep.subr.bf16.mxu0 %v1070
    %1209 = vmatpush1.bf16.msra.mxu0 %v1069
    %1210 = vmatprep.subr.bf16.mxu0 %v1072
    %1211 = vmatpush1.bf16.msra.mxu0 %v1071
    %1212 = vmatprep.subr.bf16.mxu0 %v1074
    %1213 = vmatpush1.bf16.msra.mxu0 %v1073
    %1214 = vmatprep.subr.bf16.mxu0 %v1076
    %1215 = vmatpush1.bf16.msra.mxu0 %v1075
    %1216 = vmatprep.subr.bf16.mxu0 %v1078
    %1217 = vmatpush1.bf16.msra.mxu0 %v1077
    %1218 = vmatprep.subr.bf16.mxu0 %v1080
    %1219 = vmatpush1.bf16.msra.mxu0 %v1079
    %1220 = vmatprep.subr.bf16.mxu0 %v1082
    %1221 = vmatpush1.bf16.msra.mxu0 %v1081
    %1222 = vmatprep.subr.bf16.mxu0 %v1084
    %1223 = vmatpush1.bf16.msra.mxu0 %v1083
    %1224 = vmatprep.subr.bf16.mxu0 %v1086
    %1225 = vmatpush1.bf16.msra.mxu0 %v1085
    %1226 = vmatprep.subr.bf16.mxu0 %v1088
    %1227 = vmatpush1.bf16.msra.mxu0 %v1087
    %1228 = vmatprep.mubr.bf16.mxu0 %v756
    %1229 = vmatmul.mubr.bf16.gmra.mrb[0].mxu0 %v755
    %v1230 = vpop.f32.mrb[0].mxu0
    %v1231 = vadd.f32 %v1188, %v1230
    %v1232 = vpop.f32.mrb[0].mxu0
    %v1233 = vadd.f32 %v1190, %v1232
    %v1234 = vpop.f32.mrb[0].mxu0
    %v1235 = vadd.f32 %v1192, %v1234
    %v1236 = vpop.f32.mrb[0].mxu0
    %v1237 = vadd.f32 %v1194, %v1236
    %1238 = vdwg.mxu0
    %v1239 = vmax.f32 %v1231, 0.0
    %v1240 = vmax.f32 %v1233, 0.0
    %v1241 = vmax.f32 %v1235, 0.0
    %v1242 = vmax.f32 %v1237, 0.0
    %v1243 = vpack.c.bf16 %v1241, %v1239
    %v1244 = vpack.c.bf16 %v1242, %v1240
    %v1245 = vld [vmem:[#allocation11] sm:$0xf]
    %v1246 = vld [vmem:[#allocation11 + $0x4] sm:$0xf]
    %v1247 = vld [vmem:[#allocation11 + $0x8] sm:$0xf]
    %v1248 = vld [vmem:[#allocation11 + $0xc] sm:$0xf]
    %v1249 = vld [vmem:[#allocation11 + $0x10] sm:$0xf]
    %v1250 = vld [vmem:[#allocation11 + $0x14] sm:$0xf]
    %v1251 = vld [vmem:[#allocation11 + $0x18] sm:$0xf]
    %v1252 = vld [vmem:[#allocation11 + $0x1c] sm:$0xf]
    %v1253 = vld [vmem:[#allocation11 + $0x20] sm:$0xf]
    %v1254 = vld [vmem:[#allocation11 + $0x24] sm:$0xf]
    %v1255 = vld [vmem:[#allocation11 + $0x28] sm:$0xf]
    %v1256 = vld [vmem:[#allocation11 + $0x2c] sm:$0xf]
    %v1257 = vld [vmem:[#allocation11 + $0x30] sm:$0xf]
    %v1258 = vld [vmem:[#allocation11 + $0x34] sm:$0xf]
    %v1259 = vld [vmem:[#allocation11 + $0x38] sm:$0xf]
    %v1260 = vld [vmem:[#allocation11 + $0x3c] sm:$0xf]
    %v1261 = vld [vmem:[#allocation11 + $0x40] sm:$0xf]
    %v1262 = vld [vmem:[#allocation11 + $0x44] sm:$0xf]
    %v1263 = vld [vmem:[#allocation11 + $0x48] sm:$0xf]
    %v1264 = vld [vmem:[#allocation11 + $0x4c] sm:$0xf]
    %v1265 = vld [vmem:[#allocation11 + $0x50] sm:$0xf]
    %v1266 = vld [vmem:[#allocation11 + $0x54] sm:$0xf]
    %v1267 = vld [vmem:[#allocation11 + $0x58] sm:$0xf]
    %v1268 = vld [vmem:[#allocation11 + $0x5c] sm:$0xf]
    %v1269 = vld [vmem:[#allocation11 + $0x60] sm:$0xf]
    %v1270 = vld [vmem:[#allocation11 + $0x64] sm:$0xf]
    %v1271 = vld [vmem:[#allocation11 + $0x68] sm:$0xf]
    %v1272 = vld [vmem:[#allocation11 + $0x6c] sm:$0xf]
    %v1273 = vld [vmem:[#allocation11 + $0x70] sm:$0xf]
    %v1274 = vld [vmem:[#allocation11 + $0x74] sm:$0xf]
    %v1275 = vld [vmem:[#allocation11 + $0x78] sm:$0xf]
    %v1276 = vld [vmem:[#allocation11 + $0x7c] sm:$0xf]
    %v1277 = vld [vmem:[%s8] sm:$0x1]
    %v1279 = vlaneseq
    %v1280 = vshrl.u32 %v1279, 7
    %v1281 = vsub.s32 0, %v1280
    %v1282 = vrot.slane %v1277, %v1281
    %v1316 = vunpack.c.l.b16 %v1245
    %v1317 = vunpack.c.l.b16 %v1246
    %v1318 = vunpack.c.l.b16 %v1247
    %v1319 = vunpack.c.l.b16 %v1248
    %v1320 = vunpack.c.l.b16 %v1249
    %v1321 = vunpack.c.l.b16 %v1250
    %v1322 = vunpack.c.l.b16 %v1251
    %v1323 = vunpack.c.l.b16 %v1252
    %v1324 = vunpack.c.l.b16 %v1253
    %v1325 = vunpack.c.l.b16 %v1254
    %v1326 = vunpack.c.l.b16 %v1255
    %v1327 = vunpack.c.l.b16 %v1256
    %v1328 = vunpack.c.l.b16 %v1257
    %v1329 = vunpack.c.l.b16 %v1258
    %v1330 = vunpack.c.l.b16 %v1259
    %v1331 = vunpack.c.l.b16 %v1260
    %v1332 = vunpack.c.l.b16 %v1261
    %v1333 = vunpack.c.l.b16 %v1262
    %v1334 = vunpack.c.l.b16 %v1263
    %v1335 = vunpack.c.l.b16 %v1264
    %v1336 = vunpack.c.l.b16 %v1265
    %v1337 = vunpack.c.l.b16 %v1266
    %v1338 = vunpack.c.l.b16 %v1267
    %v1339 = vunpack.c.l.b16 %v1268
    %v1340 = vunpack.c.l.b16 %v1269
    %v1341 = vunpack.c.l.b16 %v1270
    %v1342 = vunpack.c.l.b16 %v1271
    %v1343 = vunpack.c.l.b16 %v1272
    %v1344 = vunpack.c.l.b16 %v1273
    %v1345 = vunpack.c.l.b16 %v1274
    %v1346 = vunpack.c.l.b16 %v1275
    %v1347 = vunpack.c.l.b16 %v1276
    %v1348 = vpack.c.b16 %v1317, %v1316
    %v1349 = vpack.c.b16 %v1319, %v1318
    %v1350 = vpack.c.b16 %v1321, %v1320
    %v1351 = vpack.c.b16 %v1323, %v1322
    %v1352 = vpack.c.b16 %v1325, %v1324
    %v1353 = vpack.c.b16 %v1327, %v1326
    %v1354 = vpack.c.b16 %v1329, %v1328
    %v1355 = vpack.c.b16 %v1331, %v1330
    %v1356 = vpack.c.b16 %v1333, %v1332
    %v1357 = vpack.c.b16 %v1335, %v1334
    %v1358 = vpack.c.b16 %v1337, %v1336
    %v1359 = vpack.c.b16 %v1339, %v1338
    %v1360 = vpack.c.b16 %v1341, %v1340
    %v1361 = vpack.c.b16 %v1343, %v1342
    %v1362 = vpack.c.b16 %v1345, %v1344
    %v1363 = vpack.c.b16 %v1347, %v1346
    %1380 = vmatprep.subr.bf16.mxu0 0
    %1381 = vmatpush1.bf16.msra.mxu0 %v1348
    %1382 = vmatprep.subr.bf16.mxu0 0
    %1383 = vmatpush1.bf16.msra.mxu0 %v1349
    %1384 = vmatprep.subr.bf16.mxu0 0
    %1385 = vmatpush1.bf16.msra.mxu0 %v1350
    %1386 = vmatprep.subr.bf16.mxu0 0
    %1387 = vmatpush1.bf16.msra.mxu0 %v1351
    %1388 = vmatprep.subr.bf16.mxu0 0
    %1389 = vmatpush1.bf16.msra.mxu0 %v1352
    %1390 = vmatprep.subr.bf16.mxu0 0
    %1391 = vmatpush1.bf16.msra.mxu0 %v1353
    %1392 = vmatprep.subr.bf16.mxu0 0
    %1393 = vmatpush1.bf16.msra.mxu0 %v1354
    %1394 = vmatprep.subr.bf16.mxu0 0
    %1395 = vmatpush1.bf16.msra.mxu0 %v1355
    %1396 = vmatprep.subr.bf16.mxu0 0
    %1397 = vmatpush1.bf16.msra.mxu0 %v1356
    %1398 = vmatprep.subr.bf16.mxu0 0
    %1399 = vmatpush1.bf16.msra.mxu0 %v1357
    %1400 = vmatprep.subr.bf16.mxu0 0
    %1401 = vmatpush1.bf16.msra.mxu0 %v1358
    %1402 = vmatprep.subr.bf16.mxu0 0
    %1403 = vmatpush1.bf16.msra.mxu0 %v1359
    %1404 = vmatprep.subr.bf16.mxu0 0
    %1405 = vmatpush1.bf16.msra.mxu0 %v1360
    %1406 = vmatprep.subr.bf16.mxu0 0
    %1407 = vmatpush1.bf16.msra.mxu0 %v1361
    %1408 = vmatprep.subr.bf16.mxu0 0
    %1409 = vmatpush1.bf16.msra.mxu0 %v1362
    %1410 = vmatprep.subr.bf16.mxu0 0
    %1411 = vmatpush1.bf16.msra.mxu0 %v1363
    %1412 = vmatprep.mubr.bf16.mxu0 %v1244
    %1413 = vmatmul.mubr.bf16.gmra.mrb[0].mxu0 %v1243
    %v1414 = vpop.f32.mrb[0].mxu0
    %v1415 = vadd.f32 %v1282, %v1414
    %v1416 = vpop.f32.mrb[0].mxu0
    %v1417 = vpop.f32.mrb[0].mxu0
    %v1418 = vadd.f32 %v1282, %v1417
    %v1419 = vpop.f32.mrb[0].mxu0
    %1420 = vdwg.mxu0
    %v1421 = vmax.f32 %v1415, 0.0
    %v1422 = vmax.f32 %v1418, 0.0
    %v1423 = vpack.c.bf16 %v1422, %v1421
    %v1424 = vld [vmem:[#allocation13] sm:$0xf]
    %v1425 = vld [vmem:[#allocation13 + $0x4] sm:$0xf]
    %v1426 = vld [vmem:[#allocation13 + $0x8] sm:$0xf]
    %v1427 = vld [vmem:[#allocation13 + $0xc] sm:$0xf]
    %v1428 = vld [vmem:[#allocation13 + $0x10] sm:$0xf]
    %v1429 = vld [vmem:[#allocation13 + $0x14] sm:$0xf]
    %v1430 = vld [vmem:[#allocation13 + $0x18] sm:$0xf]
    %v1431 = vld [vmem:[#allocation13 + $0x1c] sm:$0xf]
    %v1432 = vld [vmem:[#allocation13 + $0x20] sm:$0xf]
    %v1433 = vld [vmem:[#allocation13 + $0x24] sm:$0xf]
    %v1434 = vld [vmem:[#allocation13 + $0x28] sm:$0xf]
    %v1435 = vld [vmem:[#allocation13 + $0x2c] sm:$0xf]
    %v1436 = vld [vmem:[#allocation13 + $0x30] sm:$0xf]
    %v1437 = vld [vmem:[#allocation13 + $0x34] sm:$0xf]
    %v1438 = vld [vmem:[#allocation13 + $0x38] sm:$0xf]
    %v1439 = vld [vmem:[#allocation13 + $0x3c] sm:$0xf]
    %v1440 = vld [vmem:[%s10] sm:$0x1]
    %v1442 = vlaneseq
    %v1443 = vshrl.u32 %v1442, 7
    %v1444 = vsub.s32 0, %v1443
    %v1445 = vrot.slane %v1440, %v1444
    %v1463 = vunpack.c.l.b16 %v1424
    %v1464 = vunpack.c.l.b16 %v1425
    %v1465 = vunpack.c.l.b16 %v1426
    %v1466 = vunpack.c.l.b16 %v1427
    %v1467 = vunpack.c.l.b16 %v1428
    %v1468 = vunpack.c.l.b16 %v1429
    %v1469 = vunpack.c.l.b16 %v1430
    %v1470 = vunpack.c.l.b16 %v1431
    %v1471 = vunpack.c.l.b16 %v1432
    %v1472 = vunpack.c.l.b16 %v1433
    %v1473 = vunpack.c.l.b16 %v1434
    %v1474 = vunpack.c.l.b16 %v1435
    %v1475 = vunpack.c.l.b16 %v1436
    %v1476 = vunpack.c.l.b16 %v1437
    %v1477 = vunpack.c.l.b16 %v1438
    %v1478 = vunpack.c.l.b16 %v1439
    %v1479 = vpack.c.b16 %v1464, %v1463
    %v1480 = vpack.c.b16 %v1466, %v1465
    %v1481 = vpack.c.b16 %v1468, %v1467
    %v1482 = vpack.c.b16 %v1470, %v1469
    %v1483 = vpack.c.b16 %v1472, %v1471
    %v1484 = vpack.c.b16 %v1474, %v1473
    %v1485 = vpack.c.b16 %v1476, %v1475
    %v1486 = vpack.c.b16 %v1478, %v1477
    %1495 = vmatprep.subr.bf16.mxu0 0
    %1496 = vmatpush1.bf16.msra.mxu0 %v1479
    %1497 = vmatprep.subr.bf16.mxu0 0
    %1498 = vmatpush1.bf16.msra.mxu0 %v1480
    %1499 = vmatprep.subr.bf16.mxu0 0
    %1500 = vmatpush1.bf16.msra.mxu0 %v1481
    %1501 = vmatprep.subr.bf16.mxu0 0
    %1502 = vmatpush1.bf16.msra.mxu0 %v1482
    %1503 = vmatprep.subr.bf16.mxu0 0
    %1504 = vmatpush1.bf16.msra.mxu0 %v1483
    %1505 = vmatprep.subr.bf16.mxu0 0
    %1506 = vmatpush1.bf16.msra.mxu0 %v1484
    %1507 = vmatprep.subr.bf16.mxu0 0
    %1508 = vmatpush1.bf16.msra.mxu0 %v1485
    %1509 = vmatprep.subr.bf16.mxu0 0
    %1510 = vmatpush1.bf16.msra.mxu0 %v1486
    %1511 = vmatprep.subr.bf16.mxu0 0
    %1512 = vmatpush1.bf16.msra.mxu0 0
    %1513 = vmatprep.subr.bf16.mxu0 0
    %1514 = vmatpush1.bf16.msra.mxu0 0
    %1515 = vmatprep.subr.bf16.mxu0 0
    %1516 = vmatpush1.bf16.msra.mxu0 0
    %1517 = vmatprep.subr.bf16.mxu0 0
    %1518 = vmatpush1.bf16.msra.mxu0 0
    %1519 = vmatprep.subr.bf16.mxu0 0
    %1520 = vmatpush1.bf16.msra.mxu0 0
    %1521 = vmatprep.subr.bf16.mxu0 0
    %1522 = vmatpush1.bf16.msra.mxu0 0
    %1523 = vmatprep.subr.bf16.mxu0 0
    %1524 = vmatpush1.bf16.msra.mxu0 0
    %1525 = vmatprep.subr.bf16.mxu0 0
    %1526 = vmatpush1.bf16.msra.mxu0 0
    %1527 = vmatprep.mubr.bf16.mxu0 0
    %1528 = vmatmul.mubr.bf16.gmra.mrb[0].mxu0 %v1423
    %v1529 = vpop.f32.mrb[0].mxu0
    %v1530 = vadd.f32 %v1445, %v1529
    %v1531 = vpop.f32.mrb[0].mxu0
    %v1532 = vpop.f32.mrb[0].mxu0
    %v1533 = vadd.f32 %v1445, %v1532
    %v1534 = vpop.f32.mrb[0].mxu0
    %1535 = vdwg.mxu0
    %v1536 = vmax.f32 %v1530, 0.0
    %v1537 = vmax.f32 %v1533, 0.0
    %v1538 = vpack.c.bf16 %v1537, %v1536
    %v1539 = vld [vmem:[#allocation14] sm:$0xf]
    %v1540 = vld [vmem:[#allocation14 + $0x4] sm:$0xf]
    %v1541 = vld [vmem:[#allocation14 + $0x8] sm:$0xf]
    %v1542 = vld [vmem:[#allocation14 + $0xc] sm:$0xf]
    %v1543 = vld [vmem:[#allocation14 + $0x10] sm:$0xf]
    %v1544 = vld [vmem:[#allocation14 + $0x14] sm:$0xf]
    %v1545 = vld [vmem:[#allocation14 + $0x18] sm:$0xf]
    %v1546 = vld [vmem:[#allocation14 + $0x1c] sm:$0xf]
    %v1547 = vld [vmem:[#allocation14 + $0x20] sm:$0xf]
    %v1548 = vld [vmem:[#allocation14 + $0x24] sm:$0xf]
    %v1549 = vld [vmem:[#allocation14 + $0x28] sm:$0xf]
    %v1550 = vld [vmem:[#allocation14 + $0x2c] sm:$0xf]
    %v1551 = vld [vmem:[#allocation14 + $0x30] sm:$0xf]
    %v1552 = vld [vmem:[#allocation14 + $0x34] sm:$0xf]
    %v1553 = vld [vmem:[#allocation14 + $0x38] sm:$0xf]
    %v1554 = vld [vmem:[#allocation14 + $0x3c] sm:$0xf]
    %v1555 = vld [vmem:[%s12] sm:$0x1]
    %v1557 = vlaneseq
    %v1558 = vshrl.u32 %v1557, 7
    %v1559 = vsub.s32 0, %v1558
    %v1560 = vrot.slane %v1555, %v1559
    %v1578 = vunpack.c.l.b16 %v1539
    %v1579 = vunpack.c.l.b16 %v1540
    %v1580 = vunpack.c.l.b16 %v1541
    %v1581 = vunpack.c.l.b16 %v1542
    %v1582 = vunpack.c.l.b16 %v1543
    %v1583 = vunpack.c.l.b16 %v1544
    %v1584 = vunpack.c.l.b16 %v1545
    %v1585 = vunpack.c.l.b16 %v1546
    %v1586 = vunpack.c.l.b16 %v1547
    %v1587 = vunpack.c.l.b16 %v1548
    %v1588 = vunpack.c.l.b16 %v1549
    %v1589 = vunpack.c.l.b16 %v1550
    %v1590 = vunpack.c.l.b16 %v1551
    %v1591 = vunpack.c.l.b16 %v1552
    %v1592 = vunpack.c.l.b16 %v1553
    %v1593 = vunpack.c.l.b16 %v1554
    %v1594 = vpack.c.b16 %v1579, %v1578
    %v1595 = vpack.c.b16 %v1581, %v1580
    %v1596 = vpack.c.b16 %v1583, %v1582
    %v1597 = vpack.c.b16 %v1585, %v1584
    %v1598 = vpack.c.b16 %v1587, %v1586
    %v1599 = vpack.c.b16 %v1589, %v1588
    %v1600 = vpack.c.b16 %v1591, %v1590
    %v1601 = vpack.c.b16 %v1593, %v1592
    %1610 = vmatprep.subr.bf16.mxu0 0
    %1611 = vmatpush1.bf16.msra.mxu0 %v1594
    %1612 = vmatprep.subr.bf16.mxu0 0
    %1613 = vmatpush1.bf16.msra.mxu0 %v1595
    %1614 = vmatprep.subr.bf16.mxu0 0
    %1615 = vmatpush1.bf16.msra.mxu0 %v1596
    %1616 = vmatprep.subr.bf16.mxu0 0
    %1617 = vmatpush1.bf16.msra.mxu0 %v1597
    %1618 = vmatprep.subr.bf16.mxu0 0
    %1619 = vmatpush1.bf16.msra.mxu0 %v1598
    %1620 = vmatprep.subr.bf16.mxu0 0
    %1621 = vmatpush1.bf16.msra.mxu0 %v1599
    %1622 = vmatprep.subr.bf16.mxu0 0
    %1623 = vmatpush1.bf16.msra.mxu0 %v1600
    %1624 = vmatprep.subr.bf16.mxu0 0
    %1625 = vmatpush1.bf16.msra.mxu0 %v1601
    %1626 = vmatprep.subr.bf16.mxu0 0
    %1627 = vmatpush1.bf16.msra.mxu0 0
    %1628 = vmatprep.subr.bf16.mxu0 0
    %1629 = vmatpush1.bf16.msra.mxu0 0
    %1630 = vmatprep.subr.bf16.mxu0 0
    %1631 = vmatpush1.bf16.msra.mxu0 0
    %1632 = vmatprep.subr.bf16.mxu0 0
    %1633 = vmatpush1.bf16.msra.mxu0 0
    %1634 = vmatprep.subr.bf16.mxu0 0
    %1635 = vmatpush1.bf16.msra.mxu0 0
    %1636 = vmatprep.subr.bf16.mxu0 0
    %1637 = vmatpush1.bf16.msra.mxu0 0
    %1638 = vmatprep.subr.bf16.mxu0 0
    %1639 = vmatpush1.bf16.msra.mxu0 0
    %1640 = vmatprep.subr.bf16.mxu0 0
    %1641 = vmatpush1.bf16.msra.mxu0 0
    %1642 = vmatprep.mubr.bf16.mxu0 0
    %1643 = vmatmul.mubr.bf16.gmra.mrb[0].mxu0 %v1538
    %v1644 = vpop.f32.mrb[0].mxu0
    %v1645 = vadd.f32 %v1560, %v1644
    %v1646 = vpop.f32.mrb[0].mxu0
    %v1647 = vpop.f32.mrb[0].mxu0
    %v1648 = vadd.f32 %v1560, %v1647
    %v1649 = vpop.f32.mrb[0].mxu0
    %1650 = vdwg.mxu0
    %v1651 = vxor.u32 %v1645, 2147483648
    %v1652 = vxor.u32 %v1648, 2147483648
    %v1653 = vmul.f32 %v1651, 1.442695
    %v1654 = vpow.pop %v1653
    %v1655 = vmul.f32 %v1652, 1.442695
    %v1656 = vpow.pop %v1655
    %v1657 = vadd.f32 %v1654, 1.0
    %v1658 = vadd.f32 %v1656, 1.0
    %v1659 = vrcp.pop %v1657
    %v1660 = vmul.f32 1.0, %v1659
    %v1661 = vrcp.pop %v1658
    %v1662 = vmul.f32 1.0, %v1661
    %v1663 = vmul.f32 %v1660, 4.0
    %v1664 = vmul.f32 %v1662, 4.0
    %v1665 = vpack.c.bf16 %v1664, %v1663
    %v1667 = vunpack.c.l.b16 %v1665
    %v1668 = vunpack.c.h.b16 %v1665
    %v1669 = vpack.c.b16 %v1667, %v1667
    %v1670 = vpack.c.b16 %v1668, %v1668
    %1673 = vst [vmem:[#allocation16] sm:$0xf] %v1669
    %1674 = vst [vmem:[#allocation16 + $0x4] sm:$0xf] %v1670
    // Predicated region
    $region86: #{tpu_custom_call.1} parent=1 // pred_check
      _
    $region87: #{tpu_custom_call.1} parent=1 // pred_check_branch
      %1676 = sbr.rel (0) target = $region89
    $region88: #{tpu_custom_call.1} parent=1 // pred_region
      %s1678 = ssub.s32 128, 128
      %1679 = vsyncadd [#allocation4], %s1678
      %s1680 = sshll.u32 [#allocation16], 4
      %s1681 = int_to_ptr.vmem [resolvable:$true] %s1680
      %1686 = dma.vmem_to_hbm [thread:$0]  %s1681, 128, %s13, [#allocation4], 64, 64, 4
    $region89: #{tpu_custom_call.1} parent=1 // pred_fallthru
      _
    // Predicated region
    $region90: #{tpu_custom_call.1} parent=1 // pred_check
      _
    $region91: #{tpu_custom_call.1} parent=1 // pred_check_branch
      %1688 = sbr.rel (0) target = $region93
    $region92: #{tpu_custom_call.1} parent=1 // pred_region
      %1689 = dma.done [#allocation4], 128
    $region93: #{tpu_custom_call.1} parent=1 // pred_fallthru
      _
    %1690 = vsyncpa [#allocation3], 1
    %1691 = vsyncpa [#allocation6], 1
    %1692 = vsyncpa [#allocation9], 1
    %1693 = vsyncpa [#allocation12], 1
    %1694 = vsyncpa [#allocation15], 1
    %1695 = vsyncpa [#allocation4], 1

</llo_original>
